<compile_context>
chip_gen: v7x
topology: tpu7x:2x2x1
jax: 0.10.0
libtpu: 0.0.40
codegen_flags: <defaults>
</compile_context>

<pallas_src>
import functools

import jax
import jax.numpy as jnp
from jax.experimental import pallas as pl
from jax.experimental.pallas import tpu as pltpu

EPS = 1e-5                       # torch BatchNorm2d default
MXU_DTYPE = jnp.bfloat16         # MXU operand dtype (accumulation stays f32)

_VMEM = pl.BlockSpec(memory_space=pltpu.MemorySpace.VMEM)
_SMEM = pl.BlockSpec(memory_space=pltpu.MemorySpace.SMEM)


# ---------------------------------------------------------------------------
# In-kernel helpers (traced inside the Pallas bodies)
# ---------------------------------------------------------------------------
def _bn_train(y, gamma, beta):
    """BatchNorm2d training mode on a lane-dense (C, M) value.

    Biased batch stats over the M = N*H*W lane axis; gamma is folded into the
    rsqrt scale so there is a single full-size (C, M) multiply.
    """
    m = y.shape[1]
    mean = jnp.sum(y, axis=1, keepdims=True) * (1.0 / m)      # (C, 1) lane reduce
    yc = y - mean
    var = jnp.sum(yc * yc, axis=1, keepdims=True) * (1.0 / m)
    scale = gamma * jax.lax.rsqrt(var + EPS)                   # per-channel fold
    return yc * scale + beta


def _prelu(z, alpha):
    return jnp.where(z > 0, z, alpha * z)


def _conv3x3_from_padded(pad_ref, masks, w_flat, slab_ref, img_w, m):
    """3x3 / stride-1 / pad-1 conv on a lane-dense, halo-padded flat activation.

    pad_ref: (C, M + 2*(W+1)) f32 Ref, activation flattened over (n, h, w) with a
             zero halo of W+1 lanes on each side.
    masks:   (9, M) f32 {0,1}: tap (dy, dx) is valid where its source pixel lies
             inside the image (rules out row/column/image crossings).
    w_flat:  (Cout, 9*C) bf16, K ordered (dy, dx, cin).
    slab_ref:(9*C, M) f32 VMEM scratch that receives the tap slab.

    Every tap is a unit-stride lane slice of the Ref (no whole-tensor loads, no
    im2col in HBM); the slab is cast to bf16 once and contracted in ONE MXU matmul.
    """
    c = pad_ref.shape[0]
    halo = img_w + 1
    for dy in range(3):
        for dx in range(3):
            t = dy * 3 + dx
            off = halo + (dy - 1) * img_w + (dx - 1)
            tap = pad_ref[:, off:off + m]                       # (C, M) ref slice
            if t == 4:                                          # centre tap: mask == 1
                slab_ref[t * c:(t + 1) * c, :] = tap
            else:
                slab_ref[t * c:(t + 1) * c, :] = tap * masks[t:t + 1, :]
    slab = slab_ref[...].astype(MXU_DTYPE)                      # one bf16 cast / conv
    return jnp.dot(w_flat, slab, preferred_element_type=jnp.float32)   # (Cout, M) f32


# ---------------------------------------------------------------------------
# Fused kernels (one per ResBlock branch)
# ---------------------------------------------------------------------------
def _resblock_same_kernel(xpad_ref, masks_ref, w1_ref, w2_ref, gamma_ref, beta_ref,
                          alpha_ref, o_ref, hpad_ref, slab_ref, *, img_w):
    # xpad_ref: (Cin, M + 2*(W+1)) f32 halo-padded flat input (wrapper-prepared)
    # o_ref   : (Cout, M) f32 lane-dense output
    c_out, m = o_ref.shape
    halo = img_w + 1

    gamma = gamma_ref[...]                                      # (C, 1) f32
    beta = beta_ref[...]
    alpha = alpha_ref[0]                                        # shared PReLU slope
    masks = masks_ref[...]                                      # (9, M) f32 {0,1}

    # ---- conv1 -> BN -> PReLU (bias dropped: cancelled by BN mean subtraction) ---
    y1 = _conv3x3_from_padded(xpad_ref, masks, w1_ref[...], slab_ref, img_w, m)
    h1 = _prelu(_bn_train(y1, gamma, beta), alpha)              # (C, M) f32

    # ---- stage h1 for conv2: zero only the halo strips, write the interior once --
    hpad_ref[:, 0:halo] = jnp.zeros((c_out, halo), jnp.float32)
    hpad_ref[:, halo + m:2 * halo + m] = jnp.zeros((c_out, halo), jnp.float32)
    hpad_ref[:, halo:halo + m] = h1

    # ---- conv2 -> BN -> +identity -> PReLU ---------------------------------------
    y2 = _conv3x3_from_padded(hpad_ref, masks, w2_ref[...], slab_ref, img_w, m)
    z2 = _bn_train(y2, gamma, beta)
    identity = xpad_ref[:, halo:halo + m]                       # original input, f32
    o_ref[...] = _prelu(z2 + identity, alpha)                   # plain lane-dense vst


def _resblock_down_kernel(slab1_ref, masks_ref, idn_ref, w1_ref, w2_ref, gamma_ref,
                          beta_ref, alpha_ref, o_ref, hpad_ref, slab_ref, *, img_w):
    # slab1_ref: (9*Cin, Mo) bf16 — stride-2 conv1_ tap slab (wrapper-assembled:
    #            strided taps cannot be unit-stride slices of a flat lane-dense
    #            layout; the slab is tiny so the HBM cost is negligible).
    # idn_ref  : (Cout, Mo) f32 — maxpool(2,2) + zero-channel-pad shortcut.
    c_out, m = o_ref.shape
    halo = img_w + 1

    gamma = gamma_ref[...]
    beta = beta_ref[...]
    alpha = alpha_ref[0]
    masks = masks_ref[...]                                      # masks for Ho x Wo grid

    # ---- conv1_ (3x3, stride 2): single K = 9*Cin MXU matmul ---------------------
    y1 = jnp.dot(w1_ref[...], slab1_ref[...], preferred_element_type=jnp.float32)
    h1 = _prelu(_bn_train(y1, gamma, beta), alpha)              # (Cout, Mo) f32

    hpad_ref[:, 0:halo] = jnp.zeros((c_out, halo), jnp.float32)
    hpad_ref[:, halo + m:2 * halo + m] = jnp.zeros((c_out, halo), jnp.float32)
    hpad_ref[:, halo:halo + m] = h1

    # ---- conv2 -> BN -> +shortcut -> PReLU ---------------------------------------
    y2 = _conv3x3_from_padded(hpad_ref, masks, w2_ref[...], slab_ref, img_w, m)
    z2 = _bn_train(y2, gamma, beta)
    o_ref[...] = _prelu(z2 + idn_ref[...], alpha)


# ---------------------------------------------------------------------------
# Generation-aware VMEM handling
# ---------------------------------------------------------------------------
def _vmem_capacity_bytes():
    try:
        return int(pltpu.get_tpu_info().vmem_capacity_bytes)   # 128 MiB v5e/v6e, 64 MiB v7x
    except Exception:
        return 64 * 1024 * 1024                                 # conservative (v7x per-TC)


@functools.lru_cache(maxsize=None)
def _compiler_params():
    cap = _vmem_capacity_bytes()
    return pltpu.CompilerParams(
        vmem_limit_bytes=min(cap * 3 // 4, 96 * 1024 * 1024))   # headroom on v6e, <=48M v7x


def _check_fits_vmem(m, cin, cout, img_w):
    # Rough upper bound on the fused working set: halo-padded input, masks, the
    # hpad/slab scratches, the loaded slab and a few (C, M) f32 intermediates;
    # 2x slack for Pallas in/out copies and compiler temporaries.
    mpad = m + 2 * (img_w + 1)
    est = 4 * (cin * mpad + 9 * m + cout * mpad + 2 * 9 * cout * m + 8 * cout * m)
    cap = _vmem_capacity_bytes()
    assert 2 * est < cap, (
        "activations too large to keep the fused ResBlock VMEM-resident on this "
        "TPU generation; a tiled (two-pass BatchNorm) variant is required")


# ---------------------------------------------------------------------------
# pallas_call wrappers
# ---------------------------------------------------------------------------
def _resblock_same(xpad, masks, w1f, w2f, gamma, beta, alpha, *, img_w):
    cout = w1f.shape[0]
    m = masks.shape[1]
    kernel = functools.partial(_resblock_same_kernel, img_w=img_w)
    return pl.pallas_call(
        kernel,
        out_shape=jax.ShapeDtypeStruct((cout, m), jnp.float32),
        in_specs=[_VMEM] * 6 + [_SMEM],
        out_specs=_VMEM,
        scratch_shapes=[
            pltpu.VMEM((cout, m + 2 * (img_w + 1)), jnp.float32),   # hpad staging
            pltpu.VMEM((9 * cout, m), jnp.float32),                 # tap slab
        ],
        compiler_params=_compiler_params(),
    )(xpad, masks, w1f, w2f, gamma, beta, alpha)


def _resblock_down(slab1, masks, idn, w1f, w2f, gamma, beta, alpha, *, img_w):
    cout, m = idn.shape
    kernel = functools.partial(_resblock_down_kernel, img_w=img_w)
    return pl.pallas_call(
        kernel,
        out_shape=jax.ShapeDtypeStruct((cout, m), jnp.float32),
        in_specs=[_VMEM] * 7 + [_SMEM],
        out_specs=_VMEM,
        scratch_shapes=[
            pltpu.VMEM((cout, m + 2 * (img_w + 1)), jnp.float32),
            pltpu.VMEM((9 * cout, m), jnp.float32),
        ],
        compiler_params=_compiler_params(),
    )(slab1, masks, idn, w1f, w2f, gamma, beta, alpha)


# ---------------------------------------------------------------------------
# Host-side plumbing (layout only — no compute hoisting)
# ---------------------------------------------------------------------------
def _tap_masks(n, h, w):
    """(9, M) 0/1 masks: tap (dy, dx) is valid where the source pixel is in-image."""
    flat = jnp.arange(n * h * w, dtype=jnp.int32)
    hh = (flat // w) % h
    ww = flat % w
    rows = []
    for dy in range(3):
        for dx in range(3):
            oy, ox = dy - 1, dx - 1
            ok = (hh + oy >= 0) & (hh + oy < h) & (ww + ox >= 0) & (ww + ox < w)
            rows.append(ok.astype(jnp.float32))
    return jnp.stack(rows, axis=0)


def resblock_forward(x_nchw, params, in_channel, out_channel):
    """Pallas implementation of ResBlock.forward (NCHW in, NCHW out)."""
    x = x_nchw.astype(jnp.float32)
    n, cin, h, w = x.shape
    assert cin == in_channel
    cout = out_channel

    # Weights flattened to (Cout, 9*Cin_conv), K ordered (dy, dx, cin) to match the
    # in-kernel slab.  Conv biases are intentionally NOT passed: training-mode
    # BatchNorm's mean subtraction cancels them exactly (see f32 reference).
    w1f = jnp.transpose(params["w1"], (0, 2, 3, 1)).reshape(cout, -1).astype(MXU_DTYPE)
    w2f = jnp.transpose(params["w2"], (0, 2, 3, 1)).reshape(cout, -1).astype(MXU_DTYPE)
    gamma = params["gamma"].reshape(-1, 1).astype(jnp.float32)
    beta = params["beta"].reshape(-1, 1).astype(jnp.float32)
    alpha = params["alpha"].reshape(1).astype(jnp.float32)       # SMEM scalar

    if in_channel == out_channel:
        m = n * h * w
        halo = w + 1
        _check_fits_vmem(m, cin, cout, w)
        x_cm = jnp.transpose(x, (1, 0, 2, 3)).reshape(cin, m)    # lane-dense (C, M)
        xpad = jnp.pad(x_cm, ((0, 0), (halo, halo)))             # flat zero halo
        masks = _tap_masks(n, h, w)
        out_cm = _resblock_same(xpad, masks, w1f, w2f, gamma, beta, alpha, img_w=w)
        out = jnp.transpose(out_cm.reshape(cout, n, h, w), (1, 0, 2, 3))
    else:
        assert out_channel == 2 * in_channel, "shortcut cat(zeros) needs out = 2*in"
        assert h % 2 == 0 and w % 2 == 0
        ho, wo = h // 2, w // 2
        mo = n * ho * wo
        _check_fits_vmem(mo, cin, cout, wo)
        # Stride-2 conv1_ tap slab (9*Cin, Mo): strided windows are not lane slices
        # of a flat-M layout, so assemble this tiny bf16 slab here (layout plumbing).
        xp = jnp.pad(x, ((0, 0), (0, 0), (1, 1), (1, 1)))
        taps = []
        for dy in range(3):
            for dx in range(3):
                t = xp[:, :, dy:dy + 2 * ho:2, dx:dx + 2 * wo:2]   # (N, Cin, Ho, Wo)
                taps.append(jnp.transpose(t, (1, 0, 2, 3)).reshape(cin, mo))
        slab1 = jnp.concatenate(taps, axis=0).astype(MXU_DTYPE)
        # MaxPool2d(2,2) + zero-channel-pad shortcut, lane-dense (Cout, Mo).
        pooled = x.reshape(n, cin, ho, 2, wo, 2).max(axis=(3, 5))
        pooled_cm = jnp.transpose(pooled, (1, 0, 2, 3)).reshape(cin, mo)
        idn = jnp.concatenate([pooled_cm, jnp.zeros_like(pooled_cm)], axis=0)
        masks = _tap_masks(n, ho, wo)
        out_cm = _resblock_down(slab1, masks, idn, w1f, w2f, gamma, beta, alpha,
                                img_w=wo)
        out = jnp.transpose(out_cm.reshape(cout, n, ho, wo), (1, 0, 2, 3))

    # TODO(synk): BatchNorm running-stat updates (training-time side effect) are not
    # modeled; they do not affect the forward output.
    # TODO(synk): for activations too large to stay VMEM-resident (and to use both
    # v7x TensorCores), add a "parallel" grid over M with a two-pass BatchNorm
    # (grid-accumulated sum/sumsq, then normalize) via dimension_semantics.
    return out


# ---------------------------------------------------------------------------
# Parameters and a pure-JAX f32 reference of the PyTorch forward
# ---------------------------------------------------------------------------
def make_params(key, in_channel, out_channel):
    ks = jax.random.split(key, 6)
    return dict(
        # conv1 / conv1_ share parameter shapes (torch OIHW layout)
        w1=0.1 * jax.random.normal(ks[0], (out_channel, in_channel, 3, 3), jnp.float32),
        b1=0.1 * jax.random.normal(ks[1], (out_channel,), jnp.float32),
        w2=0.1 * jax.random.normal(ks[2], (out_channel, out_channel, 3, 3), jnp.float32),
        b2=0.1 * jax.random.normal(ks[3], (out_channel,), jnp.float32),
        # shared BatchNorm2d affine params (applied twice, as in the torch module)
        gamma=1.0 + 0.1 * jax.random.normal(ks[4], (out_channel,), jnp.float32),
        beta=0.1 * jax.random.normal(ks[5], (out_channel,), jnp.float32),
        # shared PReLU slope (PyTorch default init)
        alpha=jnp.full((1,), 0.25, jnp.float32),
    )


def resblock_reference(x, params, in_channel, out_channel):
    """Pure-JAX f32 reference (keeps the conv biases; BN cancels them exactly)."""
    def conv(inp, wgt, bias, stride):
        y = jax.lax.conv_general_dilated(
            inp, wgt, window_strides=(stride, stride), padding=((1, 1), (1, 1)),
            dimension_numbers=("NCHW", "OIHW", "NCHW"))
        return y + bias.reshape(1, -1, 1, 1)

    def bn(y):
        mean = jnp.mean(y, axis=(0, 2, 3), keepdims=True)
        var = jnp.mean((y - mean) ** 2, axis=(0, 2, 3), keepdims=True)
        return ((y - mean) * jax.lax.rsqrt(var + EPS)
                * params["gamma"].reshape(1, -1, 1, 1)
                + params["beta"].reshape(1, -1, 1, 1))

    def prelu(z):
        a = params["alpha"].reshape(())
        return jnp.where(z > 0, z, a * z)

    if in_channel == out_channel:
        o = prelu(bn(conv(x, params["w1"], params["b1"], 1)))
        o = bn(conv(o, params["w2"], params["b2"], 1))
        return prelu(o + x)
    n, c, h, w = x.shape
    pooled = x.reshape(n, c, h // 2, 2, w // 2, 2).max(axis=(3, 5))
    identity = jnp.concatenate([pooled, jnp.zeros_like(pooled)], axis=1)
    o = prelu(bn(conv(x, params["w1"], params["b1"], 2)))
    o = bn(conv(o, params["w2"], params["b2"], 1))
    return prelu(o + identity)


if __name__ == "__main__":
    key = jax.random.PRNGKey(0)
    k_x, k_a, k_b = jax.random.split(key, 3)

    N, Cin, H, W = 2, 4, 16, 16
    x = jax.random.normal(k_x, (N, Cin, H, W), jnp.float32)

    run = jax.jit(resblock_forward, static_argnums=(2, 3))
    ref = jax.jit(resblock_reference, static_argnums=(2, 3))

    # Branch 1: in_channel == out_channel (plain residual path)
    params_a = make_params(k_a, Cin, Cin)
    out_a = jax.block_until_ready(run(x, params_a, Cin, Cin))
    ref_a = ref(x, params_a, Cin, Cin)
    assert out_a.shape == (N, Cin, H, W)
    assert bool(jnp.all(jnp.isfinite(out_a)))
    assert float(jnp.max(jnp.abs(out_a - ref_a))) < 2e-1   # bf16-MXU drift tolerance

    # Branch 2: in_channel != out_channel (stride-2 conv + maxpool/zero-pad shortcut)
    Cout = 2 * Cin
    params_b = make_params(k_b, Cin, Cout)
    out_b = jax.block_until_ready(run(x, params_b, Cin, Cout))
    ref_b = ref(x, params_b, Cin, Cout)
    assert out_b.shape == (N, Cout, H // 2, W // 2)
    assert bool(jnp.all(jnp.isfinite(out_b)))
    assert float(jnp.max(jnp.abs(out_b - ref_b))) < 2e-1

    print("KERNEL_OK")
</pallas_src>

<mosaic_0001>
module attributes {stable_mosaic.version = 11 : i64} {
  func.func @_resblock_same_kernel(%arg0: memref<4x546xf32, #tpu.memory_space<vmem>>, %arg1: memref<9x512xf32, #tpu.memory_space<vmem>>, %arg2: memref<4x36xbf16, #tpu.memory_space<vmem>>, %arg3: memref<4x36xbf16, #tpu.memory_space<vmem>>, %arg4: memref<4x1xf32, #tpu.memory_space<vmem>>, %arg5: memref<4x1xf32, #tpu.memory_space<vmem>>, %arg6: memref<1xf32, #tpu.memory_space<smem>>, %arg7: memref<4x512xf32, #tpu.memory_space<vmem>>, %arg8: memref<4x546xf32, #tpu.memory_space<vmem>>, %arg9: memref<36x512xf32, #tpu.memory_space<vmem>>) attributes {dimension_semantics = [], scalar_prefetch = 0 : i64, scratch_operands = 2 : i64, tpu.core_type = #tpu.core_type<tc>} {
    %c0 = arith.constant 0 : index
    %c0_0 = arith.constant 0 : index
    %0 = vector.load %arg4[%c0, %c0_0] : memref<4x1xf32, #tpu.memory_space<vmem>>, vector<4x1xf32>
    %c0_1 = arith.constant 0 : index
    %c0_2 = arith.constant 0 : index
    %1 = vector.load %arg5[%c0_1, %c0_2] : memref<4x1xf32, #tpu.memory_space<vmem>>, vector<4x1xf32>
    %c0_3 = arith.constant 0 : index
    %2 = memref.load %arg6[%c0_3] : memref<1xf32, #tpu.memory_space<smem>>
    %c0_4 = arith.constant 0 : index
    %c0_5 = arith.constant 0 : index
    %3 = vector.load %arg1[%c0_4, %c0_5] : memref<9x512xf32, #tpu.memory_space<vmem>>, vector<9x512xf32>
    %c0_6 = arith.constant 0 : index
    %c0_7 = arith.constant 0 : index
    %4 = vector.load %arg2[%c0_6, %c0_7] : memref<4x36xbf16, #tpu.memory_space<vmem>>, vector<4x36xbf16>
    %c0_8 = arith.constant 0 : index
    %c0_9 = arith.constant 0 : index
    %5 = vector.load %arg0[%c0_8, %c0_9] : memref<4x546xf32, #tpu.memory_space<vmem>>, vector<4x512xf32>
    %6 = vector.extract_strided_slice %3 {offsets = [0, 0], sizes = [1, 512], strides = [1, 1]} : vector<9x512xf32> to vector<1x512xf32>
    %7 = vector.broadcast %6 : vector<1x512xf32> to vector<4x512xf32>
    %8 = arith.mulf %5, %7 : vector<4x512xf32>
    %c0_10 = arith.constant 0 : index
    %c0_11 = arith.constant 0 : index
    %9 = vector.load %arg9[%c0_10, %c0_11] : memref<36x512xf32, #tpu.memory_space<vmem>>, vector<4x512xf32>
    tpu.vector_store %arg9[%c0_10, %c0_11], %8 {strides = array<i32>} : memref<36x512xf32, #tpu.memory_space<vmem>>, vector<4x512xf32>,
    %c0_12 = arith.constant 0 : index
    %c1 = arith.constant 1 : index
    %10 = vector.load %arg0[%c0_12, %c1] : memref<4x546xf32, #tpu.memory_space<vmem>>, vector<4x512xf32>
    %11 = vector.extract_strided_slice %3 {offsets = [1, 0], sizes = [1, 512], strides = [1, 1]} : vector<9x512xf32> to vector<1x512xf32>
    %12 = vector.broadcast %11 : vector<1x512xf32> to vector<4x512xf32>
    %13 = arith.mulf %10, %12 : vector<4x512xf32>
    %c4 = arith.constant 4 : index
    %c0_13 = arith.constant 0 : index
    %14 = vector.load %arg9[%c4, %c0_13] : memref<36x512xf32, #tpu.memory_space<vmem>>, vector<4x512xf32>
    tpu.vector_store %arg9[%c4, %c0_13], %13 {strides = array<i32>} : memref<36x512xf32, #tpu.memory_space<vmem>>, vector<4x512xf32>,
    %c0_14 = arith.constant 0 : index
    %c2 = arith.constant 2 : index
    %15 = vector.load %arg0[%c0_14, %c2] : memref<4x546xf32, #tpu.memory_space<vmem>>, vector<4x512xf32>
    %16 = vector.extract_strided_slice %3 {offsets = [2, 0], sizes = [1, 512], strides = [1, 1]} : vector<9x512xf32> to vector<1x512xf32>
    %17 = vector.broadcast %16 : vector<1x512xf32> to vector<4x512xf32>
    %18 = arith.mulf %15, %17 : vector<4x512xf32>
    %c8 = arith.constant 8 : index
    %c0_15 = arith.constant 0 : index
    %19 = vector.load %arg9[%c8, %c0_15] : memref<36x512xf32, #tpu.memory_space<vmem>>, vector<4x512xf32>
    tpu.vector_store %arg9[%c8, %c0_15], %18 {strides = array<i32>} : memref<36x512xf32, #tpu.memory_space<vmem>>, vector<4x512xf32>,
    %c0_16 = arith.constant 0 : index
    %c16 = arith.constant 16 : index
    %20 = vector.load %arg0[%c0_16, %c16] : memref<4x546xf32, #tpu.memory_space<vmem>>, vector<4x512xf32>
    %21 = vector.extract_strided_slice %3 {offsets = [3, 0], sizes = [1, 512], strides = [1, 1]} : vector<9x512xf32> to vector<1x512xf32>
    %22 = vector.broadcast %21 : vector<1x512xf32> to vector<4x512xf32>
    %23 = arith.mulf %20, %22 : vector<4x512xf32>
    %c12 = arith.constant 12 : index
    %c0_17 = arith.constant 0 : index
    %24 = vector.load %arg9[%c12, %c0_17] : memref<36x512xf32, #tpu.memory_space<vmem>>, vector<4x512xf32>
    tpu.vector_store %arg9[%c12, %c0_17], %23 {strides = array<i32>} : memref<36x512xf32, #tpu.memory_space<vmem>>, vector<4x512xf32>,
    %c0_18 = arith.constant 0 : index
    %c17 = arith.constant 17 : index
    %25 = vector.load %arg0[%c0_18, %c17] : memref<4x546xf32, #tpu.memory_space<vmem>>, vector<4x512xf32>
    %c16_19 = arith.constant 16 : index
    %c0_20 = arith.constant 0 : index
    %26 = vector.load %arg9[%c16_19, %c0_20] : memref<36x512xf32, #tpu.memory_space<vmem>>, vector<4x512xf32>
    tpu.vector_store %arg9[%c16_19, %c0_20], %25 {strides = array<i32>} : memref<36x512xf32, #tpu.memory_space<vmem>>, vector<4x512xf32>,
    %c0_21 = arith.constant 0 : index
    %c18 = arith.constant 18 : index
    %27 = vector.load %arg0[%c0_21, %c18] : memref<4x546xf32, #tpu.memory_space<vmem>>, vector<4x512xf32>
    %28 = vector.extract_strided_slice %3 {offsets = [5, 0], sizes = [1, 512], strides = [1, 1]} : vector<9x512xf32> to vector<1x512xf32>
    %29 = vector.broadcast %28 : vector<1x512xf32> to vector<4x512xf32>
    %30 = arith.mulf %27, %29 : vector<4x512xf32>
    %c20 = arith.constant 20 : index
    %c0_22 = arith.constant 0 : index
    %31 = vector.load %arg9[%c20, %c0_22] : memref<36x512xf32, #tpu.memory_space<vmem>>, vector<4x512xf32>
    tpu.vector_store %arg9[%c20, %c0_22], %30 {strides = array<i32>} : memref<36x512xf32, #tpu.memory_space<vmem>>, vector<4x512xf32>,
    %c0_23 = arith.constant 0 : index
    %c32 = arith.constant 32 : index
    %32 = vector.load %arg0[%c0_23, %c32] : memref<4x546xf32, #tpu.memory_space<vmem>>, vector<4x512xf32>
    %33 = vector.extract_strided_slice %3 {offsets = [6, 0], sizes = [1, 512], strides = [1, 1]} : vector<9x512xf32> to vector<1x512xf32>
    %34 = vector.broadcast %33 : vector<1x512xf32> to vector<4x512xf32>
    %35 = arith.mulf %32, %34 : vector<4x512xf32>
    %c24 = arith.constant 24 : index
    %c0_24 = arith.constant 0 : index
    %36 = vector.load %arg9[%c24, %c0_24] : memref<36x512xf32, #tpu.memory_space<vmem>>, vector<4x512xf32>
    tpu.vector_store %arg9[%c24, %c0_24], %35 {strides = array<i32>} : memref<36x512xf32, #tpu.memory_space<vmem>>, vector<4x512xf32>,
    %c0_25 = arith.constant 0 : index
    %c33 = arith.constant 33 : index
    %37 = vector.load %arg0[%c0_25, %c33] : memref<4x546xf32, #tpu.memory_space<vmem>>, vector<4x512xf32>
    %38 = vector.extract_strided_slice %3 {offsets = [7, 0], sizes = [1, 512], strides = [1, 1]} : vector<9x512xf32> to vector<1x512xf32>
    %39 = vector.broadcast %38 : vector<1x512xf32> to vector<4x512xf32>
    %40 = arith.mulf %37, %39 : vector<4x512xf32>
    %c28 = arith.constant 28 : index
    %c0_26 = arith.constant 0 : index
    %41 = vector.load %arg9[%c28, %c0_26] : memref<36x512xf32, #tpu.memory_space<vmem>>, vector<4x512xf32>
    tpu.vector_store %arg9[%c28, %c0_26], %40 {strides = array<i32>} : memref<36x512xf32, #tpu.memory_space<vmem>>, vector<4x512xf32>,
    %c0_27 = arith.constant 0 : index
    %c34 = arith.constant 34 : index
    %42 = vector.load %arg0[%c0_27, %c34] : memref<4x546xf32, #tpu.memory_space<vmem>>, vector<4x512xf32>
    %43 = vector.extract_strided_slice %3 {offsets = [8, 0], sizes = [1, 512], strides = [1, 1]} : vector<9x512xf32> to vector<1x512xf32>
    %44 = vector.broadcast %43 : vector<1x512xf32> to vector<4x512xf32>
    %45 = arith.mulf %42, %44 : vector<4x512xf32>
    %c32_28 = arith.constant 32 : index
    %c0_29 = arith.constant 0 : index
    %46 = vector.load %arg9[%c32_28, %c0_29] : memref<36x512xf32, #tpu.memory_space<vmem>>, vector<4x512xf32>
    tpu.vector_store %arg9[%c32_28, %c0_29], %45 {strides = array<i32>} : memref<36x512xf32, #tpu.memory_space<vmem>>, vector<4x512xf32>,
    %c0_30 = arith.constant 0 : index
    %c0_31 = arith.constant 0 : index
    %47 = vector.load %arg9[%c0_30, %c0_31] : memref<36x512xf32, #tpu.memory_space<vmem>>, vector<36x512xf32>
    %48 = arith.truncf %47 : vector<36x512xf32> to vector<36x512xbf16>
    %cst = arith.constant dense<0.000000e+00> : vector<4x512xf32>
    %49 = tpu.matmul %4, %48, %cst {dimension_numbers = #tpu.dot_dimension_numbers<[1], [0], [0], [1], [0, 0, 1, 1], [], []>} : vector<4x36xbf16>, vector<36x512xbf16>, vector<4x512xf32> -> vector<4x512xf32>
    %cst_32 = arith.constant dense<0.000000e+00> : vector<4xf32>
    %50 = vector.multi_reduction <add>, %49, %cst_32 [1] : vector<4x512xf32> to vector<4xf32>
    %51 = vector.shape_cast %50 : vector<4xf32> to vector<4x1xf32>
    %cst_33 = arith.constant 0.001953125 : f32
    %52 = vector.broadcast %cst_33 : f32 to vector<4x1xf32>
    %53 = arith.mulf %51, %52 : vector<4x1xf32>
    %54 = vector.broadcast %53 : vector<4x1xf32> to vector<4x512xf32>
    %55 = arith.subf %49, %54 : vector<4x512xf32>
    %56 = arith.mulf %55, %55 : vector<4x512xf32>
    %cst_34 = arith.constant dense<0.000000e+00> : vector<4xf32>
    %57 = vector.multi_reduction <add>, %56, %cst_34 [1] : vector<4x512xf32> to vector<4xf32>
    %58 = vector.shape_cast %57 : vector<4xf32> to vector<4x1xf32>
    %cst_35 = arith.constant 0.001953125 : f32
    %59 = vector.broadcast %cst_35 : f32 to vector<4x1xf32>
    %60 = arith.mulf %58, %59 : vector<4x1xf32>
    %cst_36 = arith.constant 9.99999974E-6 : f32
    %61 = vector.broadcast %cst_36 : f32 to vector<4x1xf32>
    %62 = arith.addf %60, %61 : vector<4x1xf32>
    %63 = math.rsqrt %62 : vector<4x1xf32>
    %64 = arith.mulf %0, %63 : vector<4x1xf32>
    %65 = vector.broadcast %64 : vector<4x1xf32> to vector<4x512xf32>
    %66 = arith.mulf %55, %65 : vector<4x512xf32>
    %67 = vector.broadcast %1 : vector<4x1xf32> to vector<4x512xf32>
    %68 = arith.addf %66, %67 : vector<4x512xf32>
    %cst_37 = arith.constant 0.000000e+00 : f32
    %69 = vector.broadcast %cst_37 : f32 to vector<4x512xf32>
    %70 = arith.cmpf ogt, %68, %69 : vector<4x512xf32>
    %71 = vector.broadcast %2 : f32 to vector<4x512xf32>
    %72 = arith.mulf %71, %68 : vector<4x512xf32>
    %73 = arith.select %70, %68, %72 : vector<4x512xi1>, vector<4x512xf32>
    %cst_38 = arith.constant 0.000000e+00 : f32
    %74 = vector.broadcast %cst_38 : f32 to vector<4x17xf32>
    %c0_39 = arith.constant 0 : index
    %c0_40 = arith.constant 0 : index
    %75 = vector.load %arg8[%c0_39, %c0_40] : memref<4x546xf32, #tpu.memory_space<vmem>>, vector<4x17xf32>
    tpu.vector_store %arg8[%c0_39, %c0_40], %74 {strides = array<i32>} : memref<4x546xf32, #tpu.memory_space<vmem>>, vector<4x17xf32>,
    %cst_41 = arith.constant 0.000000e+00 : f32
    %76 = vector.broadcast %cst_41 : f32 to vector<4x17xf32>
    %c0_42 = arith.constant 0 : index
    %c529 = arith.constant 529 : index
    %77 = vector.load %arg8[%c0_42, %c529] : memref<4x546xf32, #tpu.memory_space<vmem>>, vector<4x17xf32>
    tpu.vector_store %arg8[%c0_42, %c529], %76 {strides = array<i32>} : memref<4x546xf32, #tpu.memory_space<vmem>>, vector<4x17xf32>,
    %c0_43 = arith.constant 0 : index
    %c17_44 = arith.constant 17 : index
    %78 = vector.load %arg8[%c0_43, %c17_44] : memref<4x546xf32, #tpu.memory_space<vmem>>, vector<4x512xf32>
    tpu.vector_store %arg8[%c0_43, %c17_44], %73 {strides = array<i32>} : memref<4x546xf32, #tpu.memory_space<vmem>>, vector<4x512xf32>,
    %c0_45 = arith.constant 0 : index
    %c0_46 = arith.constant 0 : index
    %79 = vector.load %arg3[%c0_45, %c0_46] : memref<4x36xbf16, #tpu.memory_space<vmem>>, vector<4x36xbf16>
    %c0_47 = arith.constant 0 : index
    %c0_48 = arith.constant 0 : index
    %80 = vector.load %arg8[%c0_47, %c0_48] : memref<4x546xf32, #tpu.memory_space<vmem>>, vector<4x512xf32>
    %81 = vector.extract_strided_slice %3 {offsets = [0, 0], sizes = [1, 512], strides = [1, 1]} : vector<9x512xf32> to vector<1x512xf32>
    %82 = vector.broadcast %81 : vector<1x512xf32> to vector<4x512xf32>
    %83 = arith.mulf %80, %82 : vector<4x512xf32>
    %c0_49 = arith.constant 0 : index
    %c0_50 = arith.constant 0 : index
    %84 = vector.load %arg9[%c0_49, %c0_50] : memref<36x512xf32, #tpu.memory_space<vmem>>, vector<4x512xf32>
    tpu.vector_store %arg9[%c0_49, %c0_50], %83 {strides = array<i32>} : memref<36x512xf32, #tpu.memory_space<vmem>>, vector<4x512xf32>,
    %c0_51 = arith.constant 0 : index
    %c1_52 = arith.constant 1 : index
    %85 = vector.load %arg8[%c0_51, %c1_52] : memref<4x546xf32, #tpu.memory_space<vmem>>, vector<4x512xf32>
    %86 = vector.extract_strided_slice %3 {offsets = [1, 0], sizes = [1, 512], strides = [1, 1]} : vector<9x512xf32> to vector<1x512xf32>
    %87 = vector.broadcast %86 : vector<1x512xf32> to vector<4x512xf32>
    %88 = arith.mulf %85, %87 : vector<4x512xf32>
    %c4_53 = arith.constant 4 : index
    %c0_54 = arith.constant 0 : index
    %89 = vector.load %arg9[%c4_53, %c0_54] : memref<36x512xf32, #tpu.memory_space<vmem>>, vector<4x512xf32>
    tpu.vector_store %arg9[%c4_53, %c0_54], %88 {strides = array<i32>} : memref<36x512xf32, #tpu.memory_space<vmem>>, vector<4x512xf32>,
    %c0_55 = arith.constant 0 : index
    %c2_56 = arith.constant 2 : index
    %90 = vector.load %arg8[%c0_55, %c2_56] : memref<4x546xf32, #tpu.memory_space<vmem>>, vector<4x512xf32>
    %91 = vector.extract_strided_slice %3 {offsets = [2, 0], sizes = [1, 512], strides = [1, 1]} : vector<9x512xf32> to vector<1x512xf32>
    %92 = vector.broadcast %91 : vector<1x512xf32> to vector<4x512xf32>
    %93 = arith.mulf %90, %92 : vector<4x512xf32>
    %c8_57 = arith.constant 8 : index
    %c0_58 = arith.constant 0 : index
    %94 = vector.load %arg9[%c8_57, %c0_58] : memref<36x512xf32, #tpu.memory_space<vmem>>, vector<4x512xf32>
    tpu.vector_store %arg9[%c8_57, %c0_58], %93 {strides = array<i32>} : memref<36x512xf32, #tpu.memory_space<vmem>>, vector<4x512xf32>,
    %c0_59 = arith.constant 0 : index
    %c16_60 = arith.constant 16 : index
    %95 = vector.load %arg8[%c0_59, %c16_60] : memref<4x546xf32, #tpu.memory_space<vmem>>, vector<4x512xf32>
    %96 = vector.extract_strided_slice %3 {offsets = [3, 0], sizes = [1, 512], strides = [1, 1]} : vector<9x512xf32> to vector<1x512xf32>
    %97 = vector.broadcast %96 : vector<1x512xf32> to vector<4x512xf32>
    %98 = arith.mulf %95, %97 : vector<4x512xf32>
    %c12_61 = arith.constant 12 : index
    %c0_62 = arith.constant 0 : index
    %99 = vector.load %arg9[%c12_61, %c0_62] : memref<36x512xf32, #tpu.memory_space<vmem>>, vector<4x512xf32>
    tpu.vector_store %arg9[%c12_61, %c0_62], %98 {strides = array<i32>} : memref<36x512xf32, #tpu.memory_space<vmem>>, vector<4x512xf32>,
    %c0_63 = arith.constant 0 : index
    %c17_64 = arith.constant 17 : index
    %100 = vector.load %arg8[%c0_63, %c17_64] : memref<4x546xf32, #tpu.memory_space<vmem>>, vector<4x512xf32>
    %c16_65 = arith.constant 16 : index
    %c0_66 = arith.constant 0 : index
    %101 = vector.load %arg9[%c16_65, %c0_66] : memref<36x512xf32, #tpu.memory_space<vmem>>, vector<4x512xf32>
    tpu.vector_store %arg9[%c16_65, %c0_66], %100 {strides = array<i32>} : memref<36x512xf32, #tpu.memory_space<vmem>>, vector<4x512xf32>,
    %c0_67 = arith.constant 0 : index
    %c18_68 = arith.constant 18 : index
    %102 = vector.load %arg8[%c0_67, %c18_68] : memref<4x546xf32, #tpu.memory_space<vmem>>, vector<4x512xf32>
    %103 = vector.extract_strided_slice %3 {offsets = [5, 0], sizes = [1, 512], strides = [1, 1]} : vector<9x512xf32> to vector<1x512xf32>
    %104 = vector.broadcast %103 : vector<1x512xf32> to vector<4x512xf32>
    %105 = arith.mulf %102, %104 : vector<4x512xf32>
    %c20_69 = arith.constant 20 : index
    %c0_70 = arith.constant 0 : index
    %106 = vector.load %arg9[%c20_69, %c0_70] : memref<36x512xf32, #tpu.memory_space<vmem>>, vector<4x512xf32>
    tpu.vector_store %arg9[%c20_69, %c0_70], %105 {strides = array<i32>} : memref<36x512xf32, #tpu.memory_space<vmem>>, vector<4x512xf32>,
    %c0_71 = arith.constant 0 : index
    %c32_72 = arith.constant 32 : index
    %107 = vector.load %arg8[%c0_71, %c32_72] : memref<4x546xf32, #tpu.memory_space<vmem>>, vector<4x512xf32>
    %108 = vector.extract_strided_slice %3 {offsets = [6, 0], sizes = [1, 512], strides = [1, 1]} : vector<9x512xf32> to vector<1x512xf32>
    %109 = vector.broadcast %108 : vector<1x512xf32> to vector<4x512xf32>
    %110 = arith.mulf %107, %109 : vector<4x512xf32>
    %c24_73 = arith.constant 24 : index
    %c0_74 = arith.constant 0 : index
    %111 = vector.load %arg9[%c24_73, %c0_74] : memref<36x512xf32, #tpu.memory_space<vmem>>, vector<4x512xf32>
    tpu.vector_store %arg9[%c24_73, %c0_74], %110 {strides = array<i32>} : memref<36x512xf32, #tpu.memory_space<vmem>>, vector<4x512xf32>,
    %c0_75 = arith.constant 0 : index
    %c33_76 = arith.constant 33 : index
    %112 = vector.load %arg8[%c0_75, %c33_76] : memref<4x546xf32, #tpu.memory_space<vmem>>, vector<4x512xf32>
    %113 = vector.extract_strided_slice %3 {offsets = [7, 0], sizes = [1, 512], strides = [1, 1]} : vector<9x512xf32> to vector<1x512xf32>
    %114 = vector.broadcast %113 : vector<1x512xf32> to vector<4x512xf32>
    %115 = arith.mulf %112, %114 : vector<4x512xf32>
    %c28_77 = arith.constant 28 : index
    %c0_78 = arith.constant 0 : index
    %116 = vector.load %arg9[%c28_77, %c0_78] : memref<36x512xf32, #tpu.memory_space<vmem>>, vector<4x512xf32>
    tpu.vector_store %arg9[%c28_77, %c0_78], %115 {strides = array<i32>} : memref<36x512xf32, #tpu.memory_space<vmem>>, vector<4x512xf32>,
    %c0_79 = arith.constant 0 : index
    %c34_80 = arith.constant 34 : index
    %117 = vector.load %arg8[%c0_79, %c34_80] : memref<4x546xf32, #tpu.memory_space<vmem>>, vector<4x512xf32>
    %118 = vector.extract_strided_slice %3 {offsets = [8, 0], sizes = [1, 512], strides = [1, 1]} : vector<9x512xf32> to vector<1x512xf32>
    %119 = vector.broadcast %118 : vector<1x512xf32> to vector<4x512xf32>
    %120 = arith.mulf %117, %119 : vector<4x512xf32>
    %c32_81 = arith.constant 32 : index
    %c0_82 = arith.constant 0 : index
    %121 = vector.load %arg9[%c32_81, %c0_82] : memref<36x512xf32, #tpu.memory_space<vmem>>, vector<4x512xf32>
    tpu.vector_store %arg9[%c32_81, %c0_82], %120 {strides = array<i32>} : memref<36x512xf32, #tpu.memory_space<vmem>>, vector<4x512xf32>,
    %c0_83 = arith.constant 0 : index
    %c0_84 = arith.constant 0 : index
    %122 = vector.load %arg9[%c0_83, %c0_84] : memref<36x512xf32, #tpu.memory_space<vmem>>, vector<36x512xf32>
    %123 = arith.truncf %122 : vector<36x512xf32> to vector<36x512xbf16>
    %cst_85 = arith.constant dense<0.000000e+00> : vector<4x512xf32>
    %124 = tpu.matmul %79, %123, %cst_85 {dimension_numbers = #tpu.dot_dimension_numbers<[1], [0], [0], [1], [0, 0, 1, 1], [], []>} : vector<4x36xbf16>, vector<36x512xbf16>, vector<4x512xf32> -> vector<4x512xf32>
    %cst_86 = arith.constant dense<0.000000e+00> : vector<4xf32>
    %125 = vector.multi_reduction <add>, %124, %cst_86 [1] : vector<4x512xf32> to vector<4xf32>
    %126 = vector.shape_cast %125 : vector<4xf32> to vector<4x1xf32>
    %cst_87 = arith.constant 0.001953125 : f32
    %127 = vector.broadcast %cst_87 : f32 to vector<4x1xf32>
    %128 = arith.mulf %126, %127 : vector<4x1xf32>
    %129 = vector.broadcast %128 : vector<4x1xf32> to vector<4x512xf32>
    %130 = arith.subf %124, %129 : vector<4x512xf32>
    %131 = arith.mulf %130, %130 : vector<4x512xf32>
    %cst_88 = arith.constant dense<0.000000e+00> : vector<4xf32>
    %132 = vector.multi_reduction <add>, %131, %cst_88 [1] : vector<4x512xf32> to vector<4xf32>
    %133 = vector.shape_cast %132 : vector<4xf32> to vector<4x1xf32>
    %cst_89 = arith.constant 0.001953125 : f32
    %134 = vector.broadcast %cst_89 : f32 to vector<4x1xf32>
    %135 = arith.mulf %133, %134 : vector<4x1xf32>
    %cst_90 = arith.constant 9.99999974E-6 : f32
    %136 = vector.broadcast %cst_90 : f32 to vector<4x1xf32>
    %137 = arith.addf %135, %136 : vector<4x1xf32>
    %138 = math.rsqrt %137 : vector<4x1xf32>
    %139 = arith.mulf %0, %138 : vector<4x1xf32>
    %140 = vector.broadcast %139 : vector<4x1xf32> to vector<4x512xf32>
    %141 = arith.mulf %130, %140 : vector<4x512xf32>
    %142 = vector.broadcast %1 : vector<4x1xf32> to vector<4x512xf32>
    %143 = arith.addf %141, %142 : vector<4x512xf32>
    %c0_91 = arith.constant 0 : index
    %c17_92 = arith.constant 17 : index
    %144 = vector.load %arg0[%c0_91, %c17_92] : memref<4x546xf32, #tpu.memory_space<vmem>>, vector<4x512xf32>
    %145 = arith.addf %143, %144 : vector<4x512xf32>
    %cst_93 = arith.constant 0.000000e+00 : f32
    %146 = vector.broadcast %cst_93 : f32 to vector<4x512xf32>
    %147 = arith.cmpf ogt, %145, %146 : vector<4x512xf32>
    %148 = vector.broadcast %2 : f32 to vector<4x512xf32>
    %149 = arith.mulf %148, %145 : vector<4x512xf32>
    %150 = arith.select %147, %145, %149 : vector<4x512xi1>, vector<4x512xf32>
    %c0_94 = arith.constant 0 : index
    %c0_95 = arith.constant 0 : index
    %151 = vector.load %arg7[%c0_94, %c0_95] : memref<4x512xf32, #tpu.memory_space<vmem>>, vector<4x512xf32>
    tpu.vector_store %arg7[%c0_94, %c0_95], %150 {strides = array<i32>} : memref<4x512xf32, #tpu.memory_space<vmem>>, vector<4x512xf32>,
    return
  }
}

</mosaic_0001>

<llo_original>
// kernel: resblock_forward.1
$region0: #{resblock_forward.1}
  #allocation0 [shape = 'u32[]', space=smem, size = 0x4, offset = 0x4, fixed_abs, tag = 'smem constant byte address 0x4 - core index']
  #allocation1 [shape = 'u32[144,128]{1,0:T(1,128)}', space=vmem, size = 0x12000, scoped, tag = 'internal scratch']
  #allocation2 [shape = 'f32[4,546]{1,0:T(4,128)}', space=vmem, size = 0x2800, scoped, tag = 'scratch operand']
  #allocation3 [shape = 'f32[36,512]{1,0:T(8,128)}', space=vmem, size = 0x14000, scoped, tag = 'scratch operand']
  #allocation4 [shape = 'f32[1]{0:T(128)S(6)}', space=smem, size = 0x200, scoped, tag = 'scoped memory for resblock_forward.1']
  %s0 = inlined_call_operand.vmem [shape: f32[4,546], index: 0, kind: input, shape index: {}]
  %s1 = inlined_call_operand.vmem [shape: f32[9,512], index: 1, kind: input, shape index: {}]
  %s2 = inlined_call_operand.vmem [shape: bf16[4,36], index: 2, kind: input, shape index: {}]
  %s3 = inlined_call_operand.vmem [shape: bf16[4,36], index: 3, kind: input, shape index: {}]
  %s4 = inlined_call_operand.vmem [shape: f32[4,1], index: 4, kind: input, shape index: {}]
  %s5 = inlined_call_operand.vmem [shape: f32[4,1], index: 5, kind: input, shape index: {}]
  %s6 = inlined_call_operand.<no memory space> [shape: f32[1], index: 6, kind: input, shape index: {}]
  %s7 = inlined_call_operand.vmem [shape: f32[4,512], index: 7, kind: output, shape index: {}]
  %s8 = sld [smem:[#allocation0]]
  $region38: #{resblock_forward.1} parent=0
    _
  %s10 = ssub.s32 1, %s8
  %s11 = scalar_select 0, %s10, %s8
  %12 = sst [smem:[#allocation4]] %s6
  // Predicated region
  $region2: #{resblock_forward.1} parent=0 // pred_check
    _
  $region3: #{resblock_forward.1} parent=0 // pred_check_branch
    %14 = sbr.rel (0) target = $region5
  $region4: #{resblock_forward.1} parent=0 // pred_region
    _
  $region5: #{resblock_forward.1} parent=0 // pred_fallthru
    _
  // Predicated region
  $region6: #{resblock_forward.1} parent=0 // pred_check
    _
  $region7: #{resblock_forward.1} parent=0 // pred_check_branch
    %16 = sbr.rel (0) target = $region9
  $region8: #{resblock_forward.1} parent=0 // pred_region
    _
  $region9: #{resblock_forward.1} parent=0 // pred_fallthru
    _
  // Predicated region
  $region10: #{resblock_forward.1} parent=0 // pred_check
    _
  $region11: #{resblock_forward.1} parent=0 // pred_check_branch
    %18 = sbr.rel (0) target = $region13
  $region12: #{resblock_forward.1} parent=0 // pred_region
    _
  $region13: #{resblock_forward.1} parent=0 // pred_fallthru
    _
  // Predicated region
  $region14: #{resblock_forward.1} parent=0 // pred_check
    _
  $region15: #{resblock_forward.1} parent=0 // pred_check_branch
    %20 = sbr.rel (0) target = $region17
  $region16: #{resblock_forward.1} parent=0 // pred_region
    _
  $region17: #{resblock_forward.1} parent=0 // pred_fallthru
    _
  // Predicated region
  $region18: #{resblock_forward.1} parent=0 // pred_check
    _
  $region19: #{resblock_forward.1} parent=0 // pred_check_branch
    %22 = sbr.rel (0) target = $region21
  $region20: #{resblock_forward.1} parent=0 // pred_region
    _
  $region21: #{resblock_forward.1} parent=0 // pred_fallthru
    _
  // Predicated region
  $region22: #{resblock_forward.1} parent=0 // pred_check
    _
  $region23: #{resblock_forward.1} parent=0 // pred_check_branch
    %24 = sbr.rel (0) target = $region25
  $region24: #{resblock_forward.1} parent=0 // pred_region
    _
  $region25: #{resblock_forward.1} parent=0 // pred_fallthru
    _
  // Predicated region
  $region26: #{resblock_forward.1} parent=0 // pred_check
    _
  $region27: #{resblock_forward.1} parent=0 // pred_check_branch
    %26 = sbr.rel (0) target = $region29
  $region28: #{resblock_forward.1} parent=0 // pred_region
    _
  $region29: #{resblock_forward.1} parent=0 // pred_fallthru
    _
  %v28 = vld [vmem:[%s4] sm:$0xf]
  %v29 = vld [vmem:[%s5] sm:$0xf]
  %s30 = sld [smem:[#allocation4]]
  %v31 = vld [vmem:[%s1] sm:$0xff]
  %v32 = vld [vmem:[%s1 + $0x8] sm:$0xff]
  %v33 = vld [vmem:[%s1 + $0x10] sm:$0xff]
  %v34 = vld [vmem:[%s1 + $0x18] sm:$0xff]
  %v35 = vld [vmem:[%s1 + $0x20] sm:$0x1]
  %v36 = vld [vmem:[%s1 + $0x28] sm:$0x1]
  %v37 = vld [vmem:[%s1 + $0x30] sm:$0x1]
  %v38 = vld [vmem:[%s1 + $0x38] sm:$0x1]
  %v39 = vld [vmem:[%s2] sm:$0x3]
  %v40 = vld [vmem:[%s0] sm:$0xff]
  %v41 = vld [vmem:[%s0 + $0x8] sm:$0xff]
  %v42 = vlaneseq
  %v43 = vshrl.u32 %v42, 7
  %v44 = vsub.s32 0, %v43
  %v45 = vrot.slane %v31, %v44
  %v46 = vlaneseq
  %v47 = vshrl.u32 %v46, 7
  %v48 = vsub.s32 0, %v47
  %v49 = vrot.slane %v32, %v48
  %v50 = vlaneseq
  %v51 = vshrl.u32 %v50, 7
  %v52 = vsub.s32 0, %v51
  %v53 = vrot.slane %v33, %v52
  %v54 = vlaneseq
  %v55 = vshrl.u32 %v54, 7
  %v56 = vsub.s32 0, %v55
  %v57 = vrot.slane %v34, %v56
  %v62 = vcombine.low %v45, %v49
  %v63 = vcombine.low %v53, %v57
  %v66 = vmul.f32 %v40, %v62
  %v67 = vmul.f32 %v41, %v63
  %v70 = vcombine.high %v66, %v66
  %v71 = vcombine.high %v67, %v67
  %74 = vst [vmem:[#allocation3] sm:$0xf] %v66
  %75 = vst [vmem:[#allocation3 + $0x8] sm:$0xf] %v70
  %76 = vst [vmem:[#allocation3 + $0x10] sm:$0xf] %v67
  %77 = vst [vmem:[#allocation3 + $0x18] sm:$0xf] %v71
  %v78 = vld [vmem:[%s0] sm:$0xff]
  %v79 = vld [vmem:[%s0 + $0x8] sm:$0xff]
  %v80 = vld [vmem:[%s0 + $0x10] sm:$0xf]
  %v81 = vlaneseq
  %v82 = vshrl.u32 %v81, 7
  %v83 = vsub.s32 1, %v82
  %v84 = vrot.slane %v31, %v83
  %v85 = vlaneseq
  %v86 = vshrl.u32 %v85, 7
  %v87 = vsub.s32 1, %v86
  %v88 = vrot.slane %v32, %v87
  %v89 = vlaneseq
  %v90 = vshrl.u32 %v89, 7
  %v91 = vsub.s32 1, %v90
  %v92 = vrot.slane %v33, %v91
  %v93 = vlaneseq
  %v94 = vshrl.u32 %v93, 7
  %v95 = vsub.s32 1, %v94
  %v96 = vrot.slane %v34, %v95
  %v101 = vcombine.low %v84, %v88
  %v102 = vcombine.low %v92, %v96
  %103 = vrot.lane.b32.xlu0 %v101, 1
  %v104 = vpop.permute.xlu0 %103
  %105 = vrot.lane.b32.xlu0 %v102, 1
  %v106 = vpop.permute.xlu0 %105
  %v107 = vrot.slane %v104, 4
  %v108 = vrot.slane %v106, 4
  %vm109 = vcmask 7168
  %v110 = vsel %vm109, %v107, %v104
  %vm111 = vcmask 1043456
  %v112 = vsel %vm111, %v107, %v108
  %v113 = vsel %vm109, %v112, %v106
  %v117 = vmul.f32 %v78, %v110
  %v118 = vmul.f32 %v79, %v113
  %v119 = vmul.f32 %v80, %v108
  %v123 = vcombine.low %v117, %v117
  %v124 = vcombine.low %v118, %v118
  %v125 = vcombine.low %v119, %v119
  %126 = vrot.lane.b32.xlu0 %v123, 127
  %v127 = vpop.permute.xlu0 %126
  %128 = vrot.lane.b32.xlu0 %v117, 127
  %v129 = vpop.permute.xlu0 %128
  %130 = vrot.lane.b32.xlu0 %v124, 127
  %v131 = vpop.permute.xlu0 %130
  %132 = vrot.lane.b32.xlu0 %v118, 127
  %v133 = vpop.permute.xlu0 %132
  %134 = vrot.lane.b32.xlu0 %v125, 127
  %v135 = vpop.permute.xlu0 %134
  %vm136 = vcmask 1039360
  %v137 = vsel %vm136, %v127, %v129
  %v138 = vsel %vm136, %v129, %v131
  %v139 = vsel %vm136, %v131, %v133
  %v140 = vsel %vm136, %v133, %v135
  %145 = vst [vmem:[#allocation3] sm:$0xf0] %v137
  %146 = vst [vmem:[#allocation3 + $0x8] sm:$0xf0] %v138
  %147 = vst [vmem:[#allocation3 + $0x10] sm:$0xf0] %v139
  %148 = vst [vmem:[#allocation3 + $0x18] sm:$0xf0] %v140
  %v149 = vld [vmem:[%s0] sm:$0xff]
  %v150 = vld [vmem:[%s0 + $0x8] sm:$0xff]
  %v151 = vld [vmem:[%s0 + $0x10] sm:$0xf]
  %v152 = vlaneseq
  %v153 = vshrl.u32 %v152, 7
  %v154 = vsub.s32 2, %v153
  %v155 = vrot.slane %v31, %v154
  %v156 = vlaneseq
  %v157 = vshrl.u32 %v156, 7
  %v158 = vsub.s32 2, %v157
  %v159 = vrot.slane %v32, %v158
  %v160 = vlaneseq
  %v161 = vshrl.u32 %v160, 7
  %v162 = vsub.s32 2, %v161
  %v163 = vrot.slane %v33, %v162
  %v164 = vlaneseq
  %v165 = vshrl.u32 %v164, 7
  %v166 = vsub.s32 2, %v165
  %v167 = vrot.slane %v34, %v166
  %v172 = vcombine.low %v155, %v159
  %v173 = vcombine.low %v163, %v167
  %174 = vrot.lane.b32.xlu0 %v172, 2
  %v175 = vpop.permute.xlu0 %174
  %176 = vrot.lane.b32.xlu0 %v173, 2
  %v177 = vpop.permute.xlu0 %176
  %v178 = vrot.slane %v175, 4
  %v179 = vrot.slane %v177, 4
  %vm180 = vcmask 15360
  %v181 = vsel %vm180, %v178, %v175
  %v182 = vsel %vm111, %v178, %v179
  %v183 = vsel %vm180, %v182, %v177
  %v187 = vmul.f32 %v149, %v181
  %v188 = vmul.f32 %v150, %v183
  %v189 = vmul.f32 %v151, %v179
  %v193 = vcombine.high %v187, %v187
  %v194 = vcombine.high %v188, %v188
  %195 = vrot.lane.b32.xlu0 %v187, 126
  %v196 = vpop.permute.xlu0 %195
  %197 = vrot.lane.b32.xlu0 %v193, 126
  %v198 = vpop.permute.xlu0 %197
  %199 = vrot.lane.b32.xlu0 %v188, 126
  %v200 = vpop.permute.xlu0 %199
  %201 = vrot.lane.b32.xlu0 %v194, 126
  %v202 = vpop.permute.xlu0 %201
  %203 = vrot.lane.b32.xlu0 %v189, 126
  %v204 = vpop.permute.xlu0 %203
  %vm205 = vcmask 1031168
  %v206 = vsel %vm205, %v196, %v198
  %v207 = vsel %vm205, %v198, %v200
  %v208 = vsel %vm205, %v200, %v202
  %v209 = vsel %vm205, %v202, %v204
  %214 = vst [vmem:[#allocation3 + $0x20] sm:$0xf] %v206
  %215 = vst [vmem:[#allocation3 + $0x28] sm:$0xf] %v207
  %216 = vst [vmem:[#allocation3 + $0x30] sm:$0xf] %v208
  %217 = vst [vmem:[#allocation3 + $0x38] sm:$0xf] %v209
  %v218 = vld [vmem:[%s0] sm:$0xff]
  %v219 = vld [vmem:[%s0 + $0x8] sm:$0xff]
  %v220 = vld [vmem:[%s0 + $0x10] sm:$0xf]
  %v221 = vlaneseq
  %v222 = vshrl.u32 %v221, 7
  %v223 = vsub.s32 3, %v222
  %v224 = vrot.slane %v31, %v223
  %v225 = vlaneseq
  %v226 = vshrl.u32 %v225, 7
  %v227 = vsub.s32 3, %v226
  %v228 = vrot.slane %v32, %v227
  %v229 = vlaneseq
  %v230 = vshrl.u32 %v229, 7
  %v231 = vsub.s32 3, %v230
  %v232 = vrot.slane %v33, %v231
  %v233 = vlaneseq
  %v234 = vshrl.u32 %v233, 7
  %v235 = vsub.s32 3, %v234
  %v236 = vrot.slane %v34, %v235
  %v241 = vcombine.low %v224, %v228
  %v242 = vcombine.low %v232, %v236
  %243 = vrot.lane.b32.xlu0 %v241, 16
  %v244 = vpop.permute.xlu0 %243
  %245 = vrot.lane.b32.xlu0 %v242, 16
  %v246 = vpop.permute.xlu0 %245
  %v247 = vrot.slane %v244, 4
  %v248 = vrot.slane %v246, 4
  %vm249 = vcmask 130048
  %v250 = vsel %vm249, %v247, %v244
  %v251 = vsel %vm111, %v247, %v248
  %v252 = vsel %vm249, %v251, %v246
  %v256 = vmul.f32 %v218, %v250
  %v257 = vmul.f32 %v219, %v252
  %v258 = vmul.f32 %v220, %v248
  %v262 = vcombine.low %v256, %v256
  %v263 = vcombine.low %v257, %v257
  %v264 = vcombine.low %v258, %v258
  %265 = vrot.lane.b32.xlu0 %v262, 112
  %v266 = vpop.permute.xlu0 %265
  %267 = vrot.lane.b32.xlu0 %v256, 112
  %v268 = vpop.permute.xlu0 %267
  %269 = vrot.lane.b32.xlu0 %v263, 112
  %v270 = vpop.permute.xlu0 %269
  %271 = vrot.lane.b32.xlu0 %v257, 112
  %v272 = vpop.permute.xlu0 %271
  %273 = vrot.lane.b32.xlu0 %v264, 112
  %v274 = vpop.permute.xlu0 %273
  %vm275 = vcmask 916480
  %v276 = vsel %vm275, %v266, %v268
  %v277 = vsel %vm275, %v268, %v270
  %v278 = vsel %vm275, %v270, %v272
  %v279 = vsel %vm275, %v272, %v274
  %284 = vst [vmem:[#allocation3 + $0x20] sm:$0xf0] %v276
  %285 = vst [vmem:[#allocation3 + $0x28] sm:$0xf0] %v277
  %286 = vst [vmem:[#allocation3 + $0x30] sm:$0xf0] %v278
  %287 = vst [vmem:[#allocation3 + $0x38] sm:$0xf0] %v279
  %v288 = vld [vmem:[%s0] sm:$0xff]
  %v289 = vld [vmem:[%s0 + $0x8] sm:$0xff]
  %v290 = vld [vmem:[%s0 + $0x10] sm:$0xf]
  %v294 = vcombine.high %v288, %v288
  %v295 = vcombine.high %v289, %v289
  %296 = vrot.lane.b32.xlu0 %v288, 111
  %v297 = vpop.permute.xlu0 %296
  %298 = vrot.lane.b32.xlu0 %v294, 111
  %v299 = vpop.permute.xlu0 %298
  %300 = vrot.lane.b32.xlu0 %v289, 111
  %v301 = vpop.permute.xlu0 %300
  %302 = vrot.lane.b32.xlu0 %v295, 111
  %v303 = vpop.permute.xlu0 %302
  %304 = vrot.lane.b32.xlu0 %v290, 111
  %v305 = vpop.permute.xlu0 %304
  %vm306 = vcmask 908288
  %v307 = vsel %vm306, %v297, %v299
  %v308 = vsel %vm306, %v299, %v301
  %v309 = vsel %vm306, %v301, %v303
  %v310 = vsel %vm306, %v303, %v305
  %315 = vst [vmem:[#allocation3 + $0x40] sm:$0xf] %v307
  %316 = vst [vmem:[#allocation3 + $0x48] sm:$0xf] %v308
  %317 = vst [vmem:[#allocation3 + $0x50] sm:$0xf] %v309
  %318 = vst [vmem:[#allocation3 + $0x58] sm:$0xf] %v310
  %v319 = vld [vmem:[%s0] sm:$0xff]
  %v320 = vld [vmem:[%s0 + $0x8] sm:$0xff]
  %v321 = vld [vmem:[%s0 + $0x10] sm:$0xf]
  %v322 = vlaneseq
  %v323 = vshrl.u32 %v322, 7
  %v324 = vsub.s32 5, %v323
  %v325 = vrot.slane %v31, %v324
  %v326 = vlaneseq
  %v327 = vshrl.u32 %v326, 7
  %v328 = vsub.s32 5, %v327
  %v329 = vrot.slane %v32, %v328
  %v330 = vlaneseq
  %v331 = vshrl.u32 %v330, 7
  %v332 = vsub.s32 5, %v331
  %v333 = vrot.slane %v33, %v332
  %v334 = vlaneseq
  %v335 = vshrl.u32 %v334, 7
  %v336 = vsub.s32 5, %v335
  %v337 = vrot.slane %v34, %v336
  %v342 = vcombine.low %v325, %v329
  %v343 = vcombine.low %v333, %v337
  %344 = vrot.lane.b32.xlu0 %v342, 18
  %v345 = vpop.permute.xlu0 %344
  %346 = vrot.lane.b32.xlu0 %v343, 18
  %v347 = vpop.permute.xlu0 %346
  %v348 = vrot.slane %v345, 4
  %v349 = vrot.slane %v347, 4
  %vm350 = vcmask 146432
  %v351 = vsel %vm350, %v348, %v345
  %v352 = vsel %vm111, %v348, %v349
  %v353 = vsel %vm350, %v352, %v347
  %v357 = vmul.f32 %v319, %v351
  %v358 = vmul.f32 %v320, %v353
  %v359 = vmul.f32 %v321, %v349
  %v363 = vcombine.low %v357, %v357
  %v364 = vcombine.low %v358, %v358
  %v365 = vcombine.low %v359, %v359
  %366 = vrot.lane.b32.xlu0 %v363, 110
  %v367 = vpop.permute.xlu0 %366
  %368 = vrot.lane.b32.xlu0 %v357, 110
  %v369 = vpop.permute.xlu0 %368
  %370 = vrot.lane.b32.xlu0 %v364, 110
  %v371 = vpop.permute.xlu0 %370
  %372 = vrot.lane.b32.xlu0 %v358, 110
  %v373 = vpop.permute.xlu0 %372
  %374 = vrot.lane.b32.xlu0 %v365, 110
  %v375 = vpop.permute.xlu0 %374
  %vm376 = vcmask 900096
  %v377 = vsel %vm376, %v367, %v369
  %v378 = vsel %vm376, %v369, %v371
  %v379 = vsel %vm376, %v371, %v373
  %v380 = vsel %vm376, %v373, %v375
  %385 = vst [vmem:[#allocation3 + $0x40] sm:$0xf0] %v377
  %386 = vst [vmem:[#allocation3 + $0x48] sm:$0xf0] %v378
  %387 = vst [vmem:[#allocation3 + $0x50] sm:$0xf0] %v379
  %388 = vst [vmem:[#allocation3 + $0x58] sm:$0xf0] %v380
  %v389 = vld [vmem:[%s0] sm:$0xff]
  %v390 = vld [vmem:[%s0 + $0x8] sm:$0xff]
  %v391 = vld [vmem:[%s0 + $0x10] sm:$0xf]
  %v392 = vlaneseq
  %v393 = vshrl.u32 %v392, 7
  %v394 = vsub.s32 6, %v393
  %v395 = vrot.slane %v31, %v394
  %v396 = vlaneseq
  %v397 = vshrl.u32 %v396, 7
  %v398 = vsub.s32 6, %v397
  %v399 = vrot.slane %v32, %v398
  %v400 = vlaneseq
  %v401 = vshrl.u32 %v400, 7
  %v402 = vsub.s32 6, %v401
  %v403 = vrot.slane %v33, %v402
  %v404 = vlaneseq
  %v405 = vshrl.u32 %v404, 7
  %v406 = vsub.s32 6, %v405
  %v407 = vrot.slane %v34, %v406
  %v412 = vcombine.low %v395, %v399
  %v413 = vcombine.low %v403, %v407
  %414 = vrot.lane.b32.xlu0 %v412, 32
  %v415 = vpop.permute.xlu0 %414
  %416 = vrot.lane.b32.xlu0 %v413, 32
  %v417 = vpop.permute.xlu0 %416
  %v418 = vrot.slane %v415, 4
  %v419 = vrot.slane %v417, 4
  %vm420 = vcmask 261120
  %v421 = vsel %vm420, %v418, %v415
  %v422 = vsel %vm111, %v418, %v419
  %v423 = vsel %vm420, %v422, %v417
  %v427 = vmul.f32 %v389, %v421
  %v428 = vmul.f32 %v390, %v423
  %v429 = vmul.f32 %v391, %v419
  %v433 = vcombine.high %v427, %v427
  %v434 = vcombine.high %v428, %v428
  %435 = vrot.lane.b32.xlu0 %v427, 96
  %v436 = vpop.permute.xlu0 %435
  %437 = vrot.lane.b32.xlu0 %v433, 96
  %v438 = vpop.permute.xlu0 %437
  %439 = vrot.lane.b32.xlu0 %v428, 96
  %v440 = vpop.permute.xlu0 %439
  %441 = vrot.lane.b32.xlu0 %v434, 96
  %v442 = vpop.permute.xlu0 %441
  %443 = vrot.lane.b32.xlu0 %v429, 96
  %v444 = vpop.permute.xlu0 %443
  %vm445 = vcmask 785408
  %v446 = vsel %vm445, %v436, %v438
  %v447 = vsel %vm445, %v438, %v440
  %v448 = vsel %vm445, %v440, %v442
  %v449 = vsel %vm445, %v442, %v444
  %454 = vst [vmem:[#allocation3 + $0x60] sm:$0xf] %v446
  %455 = vst [vmem:[#allocation3 + $0x68] sm:$0xf] %v447
  %456 = vst [vmem:[#allocation3 + $0x70] sm:$0xf] %v448
  %457 = vst [vmem:[#allocation3 + $0x78] sm:$0xf] %v449
  %v458 = vld [vmem:[%s0] sm:$0xff]
  %v459 = vld [vmem:[%s0 + $0x8] sm:$0xff]
  %v460 = vld [vmem:[%s0 + $0x10] sm:$0xf]
  %v461 = vlaneseq
  %v462 = vshrl.u32 %v461, 7
  %v463 = vsub.s32 7, %v462
  %v464 = vrot.slane %v31, %v463
  %v465 = vlaneseq
  %v466 = vshrl.u32 %v465, 7
  %v467 = vsub.s32 7, %v466
  %v468 = vrot.slane %v32, %v467
  %v469 = vlaneseq
  %v470 = vshrl.u32 %v469, 7
  %v471 = vsub.s32 7, %v470
  %v472 = vrot.slane %v33, %v471
  %v473 = vlaneseq
  %v474 = vshrl.u32 %v473, 7
  %v475 = vsub.s32 7, %v474
  %v476 = vrot.slane %v34, %v475
  %v481 = vcombine.low %v464, %v468
  %v482 = vcombine.low %v472, %v476
  %483 = vrot.lane.b32.xlu0 %v481, 33
  %v484 = vpop.permute.xlu0 %483
  %485 = vrot.lane.b32.xlu0 %v482, 33
  %v486 = vpop.permute.xlu0 %485
  %v487 = vrot.slane %v484, 4
  %v488 = vrot.slane %v486, 4
  %vm489 = vcmask 269312
  %v490 = vsel %vm489, %v487, %v484
  %v491 = vsel %vm111, %v487, %v488
  %v492 = vsel %vm489, %v491, %v486
  %v496 = vmul.f32 %v458, %v490
  %v497 = vmul.f32 %v459, %v492
  %v498 = vmul.f32 %v460, %v488
  %v502 = vcombine.low %v496, %v496
  %v503 = vcombine.low %v497, %v497
  %v504 = vcombine.low %v498, %v498
  %505 = vrot.lane.b32.xlu0 %v502, 95
  %v506 = vpop.permute.xlu0 %505
  %507 = vrot.lane.b32.xlu0 %v496, 95
  %v508 = vpop.permute.xlu0 %507
  %509 = vrot.lane.b32.xlu0 %v503, 95
  %v510 = vpop.permute.xlu0 %509
  %511 = vrot.lane.b32.xlu0 %v497, 95
  %v512 = vpop.permute.xlu0 %511
  %513 = vrot.lane.b32.xlu0 %v504, 95
  %v514 = vpop.permute.xlu0 %513
  %vm515 = vcmask 777216
  %v516 = vsel %vm515, %v506, %v508
  %v517 = vsel %vm515, %v508, %v510
  %v518 = vsel %vm515, %v510, %v512
  %v519 = vsel %vm515, %v512, %v514
  %524 = vst [vmem:[#allocation3 + $0x60] sm:$0xf0] %v516
  %525 = vst [vmem:[#allocation3 + $0x68] sm:$0xf0] %v517
  %526 = vst [vmem:[#allocation3 + $0x70] sm:$0xf0] %v518
  %527 = vst [vmem:[#allocation3 + $0x78] sm:$0xf0] %v519
  %v528 = vld [vmem:[%s0] sm:$0xff]
  %v529 = vld [vmem:[%s0 + $0x8] sm:$0xff]
  %v530 = vld [vmem:[%s0 + $0x10] sm:$0xf]
  %v531 = vlaneseq
  %v532 = vshrl.u32 %v531, 7
  %v533 = vsub.s32 0, %v532
  %v534 = vrot.slane %v35, %v533
  %v535 = vlaneseq
  %v536 = vshrl.u32 %v535, 7
  %v537 = vsub.s32 0, %v536
  %v538 = vrot.slane %v36, %v537
  %v539 = vlaneseq
  %v540 = vshrl.u32 %v539, 7
  %v541 = vsub.s32 0, %v540
  %v542 = vrot.slane %v37, %v541
  %v543 = vlaneseq
  %v544 = vshrl.u32 %v543, 7
  %v545 = vsub.s32 0, %v544
  %v546 = vrot.slane %v38, %v545
  %v551 = vcombine.low %v534, %v538
  %v552 = vcombine.low %v542, %v546
  %553 = vrot.lane.b32.xlu0 %v551, 34
  %v554 = vpop.permute.xlu0 %553
  %555 = vrot.lane.b32.xlu0 %v552, 34
  %v556 = vpop.permute.xlu0 %555
  %v557 = vrot.slane %v554, 4
  %v558 = vrot.slane %v556, 4
  %vm559 = vcmask 277504
  %v560 = vsel %vm559, %v557, %v554
  %v561 = vsel %vm111, %v557, %v558
  %v562 = vsel %vm559, %v561, %v556
  %v566 = vmul.f32 %v528, %v560
  %v567 = vmul.f32 %v529, %v562
  %v568 = vmul.f32 %v530, %v558
  %v572 = vcombine.high %v566, %v566
  %v573 = vcombine.high %v567, %v567
  %574 = vrot.lane.b32.xlu0 %v566, 94
  %v575 = vpop.permute.xlu0 %574
  %576 = vrot.lane.b32.xlu0 %v572, 94
  %v577 = vpop.permute.xlu0 %576
  %578 = vrot.lane.b32.xlu0 %v567, 94
  %v579 = vpop.permute.xlu0 %578
  %580 = vrot.lane.b32.xlu0 %v573, 94
  %v581 = vpop.permute.xlu0 %580
  %582 = vrot.lane.b32.xlu0 %v568, 94
  %v583 = vpop.permute.xlu0 %582
  %vm584 = vcmask 769024
  %v585 = vsel %vm584, %v575, %v577
  %v586 = vsel %vm584, %v577, %v579
  %v587 = vsel %vm584, %v579, %v581
  %v588 = vsel %vm584, %v581, %v583
  %593 = vst [vmem:[#allocation3 + $0x80] sm:$0xf] %v585
  %594 = vst [vmem:[#allocation3 + $0x88] sm:$0xf] %v586
  %595 = vst [vmem:[#allocation3 + $0x90] sm:$0xf] %v587
  %596 = vst [vmem:[#allocation3 + $0x98] sm:$0xf] %v588
  %v597 = vld [vmem:[#allocation3] sm:$0xff]
  %v598 = vld [vmem:[#allocation3 + $0x8] sm:$0xff]
  %v599 = vld [vmem:[#allocation3 + $0x10] sm:$0xff]
  %v600 = vld [vmem:[#allocation3 + $0x18] sm:$0xff]
  %v601 = vld [vmem:[#allocation3 + $0x20] sm:$0xff]
  %v602 = vld [vmem:[#allocation3 + $0x28] sm:$0xff]
  %v603 = vld [vmem:[#allocation3 + $0x30] sm:$0xff]
  %v604 = vld [vmem:[#allocation3 + $0x38] sm:$0xff]
  %v605 = vld [vmem:[#allocation3 + $0x40] sm:$0xff]
  %v606 = vld [vmem:[#allocation3 + $0x48] sm:$0xff]
  %v607 = vld [vmem:[#allocation3 + $0x50] sm:$0xff]
  %v608 = vld [vmem:[#allocation3 + $0x58] sm:$0xff]
  %v609 = vld [vmem:[#allocation3 + $0x60] sm:$0xff]
  %v610 = vld [vmem:[#allocation3 + $0x68] sm:$0xff]
  %v611 = vld [vmem:[#allocation3 + $0x70] sm:$0xff]
  %v612 = vld [vmem:[#allocation3 + $0x78] sm:$0xff]
  %v613 = vld [vmem:[#allocation3 + $0x80] sm:$0xf]
  %v614 = vld [vmem:[#allocation3 + $0x88] sm:$0xf]
  %v615 = vld [vmem:[#allocation3 + $0x90] sm:$0xf]
  %v616 = vld [vmem:[#allocation3 + $0x98] sm:$0xf]
  %v617 = vpack.c.bf16 %v601, %v597
  %v618 = vpack.c.bf16 %v602, %v598
  %v619 = vpack.c.bf16 %v603, %v599
  %v620 = vpack.c.bf16 %v604, %v600
  %v621 = vpack.c.bf16 %v609, %v605
  %v622 = vpack.c.bf16 %v610, %v606
  %v623 = vpack.c.bf16 %v611, %v607
  %v624 = vpack.c.bf16 %v612, %v608
  %v625 = vpack.c.bf16 %v613, %v613
  %v626 = vpack.c.bf16 %v614, %v614
  %v627 = vpack.c.bf16 %v615, %v615
  %v628 = vpack.c.bf16 %v616, %v616
  %vm629 = vcmask 293888
  %v631 = vsel %vm629, %v39, 0
  %vm633 = vcmask 1041408
  %v635 = vsel %vm633, %v625, 0
  %v638 = vsel %vm633, %v626, 0
  %v641 = vsel %vm633, %v627, 0
  %v644 = vsel %vm633, %v628, 0
  %646 = vmatprep.subr.bf16.mxu0 %v618
  %647 = vmatpush1.bf16.msra.mxu0 %v617
  %648 = vmatprep.subr.bf16.mxu0 %v622
  %649 = vmatpush1.bf16.msra.mxu0 %v621
  %650 = vmatprep.subr.bf16.mxu0 %v638
  %651 = vmatpush1.bf16.msra.mxu0 %v635
  %652 = vmatprep.subr.bf16.mxu0 0
  %653 = vmatpush1.bf16.msra.mxu0 0
  %654 = vmatprep.subr.bf16.mxu0 0
  %655 = vmatpush1.bf16.msra.mxu0 0
  %656 = vmatprep.subr.bf16.mxu0 0
  %657 = vmatpush1.bf16.msra.mxu0 0
  %658 = vmatprep.subr.bf16.mxu0 0
  %659 = vmatpush1.bf16.msra.mxu0 0
  %660 = vmatprep.subr.bf16.mxu0 0
  %661 = vmatpush1.bf16.msra.mxu0 0
  %662 = vmatprep.subr.bf16.mxu0 0
  %663 = vmatpush1.bf16.msra.mxu0 0
  %664 = vmatprep.subr.bf16.mxu0 0
  %665 = vmatpush1.bf16.msra.mxu0 0
  %666 = vmatprep.subr.bf16.mxu0 0
  %667 = vmatpush1.bf16.msra.mxu0 0
  %668 = vmatprep.subr.bf16.mxu0 0
  %669 = vmatpush1.bf16.msra.mxu0 0
  %670 = vmatprep.subr.bf16.mxu0 0
  %671 = vmatpush1.bf16.msra.mxu0 0
  %672 = vmatprep.subr.bf16.mxu0 0
  %673 = vmatpush1.bf16.msra.mxu0 0
  %674 = vmatprep.subr.bf16.mxu0 0
  %675 = vmatpush1.bf16.msra.mxu0 0
  %676 = vmatprep.subr.bf16.mxu0 0
  %677 = vmatpush1.bf16.msra.mxu0 0
  %678 = vmatprep.mubr.bf16.mxu0 0
  %679 = vmatmul.mubr.bf16.gmra.mrb[0].mxu0 %v631
  %v680 = vpop.f32.mrb[0].mxu0
  %v681 = vadd.f32 0.0, %v680
  %v682 = vpop.f32.mrb[0].mxu0
  %v683 = vadd.f32 0.0, %v682
  %v684 = vpop.f32.mrb[0].mxu0
  %v685 = vpop.f32.mrb[0].mxu0
  %686 = vdwg.mxu0
  %687 = vmatprep.subr.bf16.mxu0 %v620
  %688 = vmatpush1.bf16.msra.mxu0 %v619
  %689 = vmatprep.subr.bf16.mxu0 %v624
  %690 = vmatpush1.bf16.msra.mxu0 %v623
  %691 = vmatprep.subr.bf16.mxu0 %v644
  %692 = vmatpush1.bf16.msra.mxu0 %v641
  %693 = vmatprep.subr.bf16.mxu0 0
  %694 = vmatpush1.bf16.msra.mxu0 0
  %695 = vmatprep.subr.bf16.mxu0 0
  %696 = vmatpush1.bf16.msra.mxu0 0
  %697 = vmatprep.subr.bf16.mxu0 0
  %698 = vmatpush1.bf16.msra.mxu0 0
  %699 = vmatprep.subr.bf16.mxu0 0
  %700 = vmatpush1.bf16.msra.mxu0 0
  %701 = vmatprep.subr.bf16.mxu0 0
  %702 = vmatpush1.bf16.msra.mxu0 0
  %703 = vmatprep.subr.bf16.mxu0 0
  %704 = vmatpush1.bf16.msra.mxu0 0
  %705 = vmatprep.subr.bf16.mxu0 0
  %706 = vmatpush1.bf16.msra.mxu0 0
  %707 = vmatprep.subr.bf16.mxu0 0
  %708 = vmatpush1.bf16.msra.mxu0 0
  %709 = vmatprep.subr.bf16.mxu0 0
  %710 = vmatpush1.bf16.msra.mxu0 0
  %711 = vmatprep.subr.bf16.mxu0 0
  %712 = vmatpush1.bf16.msra.mxu0 0
  %713 = vmatprep.subr.bf16.mxu0 0
  %714 = vmatpush1.bf16.msra.mxu0 0
  %715 = vmatprep.subr.bf16.mxu0 0
  %716 = vmatpush1.bf16.msra.mxu0 0
  %717 = vmatprep.subr.bf16.mxu0 0
  %718 = vmatpush1.bf16.msra.mxu0 0
  %719 = vmatprep.mubr.bf16.mxu0 0
  %720 = vmatmul.mubr.bf16.gmra.mrb[0].mxu0 %v631
  %v721 = vpop.f32.mrb[0].mxu0
  %v722 = vadd.f32 0.0, %v721
  %v723 = vpop.f32.mrb[0].mxu0
  %v724 = vadd.f32 0.0, %v723
  %v725 = vpop.f32.mrb[0].mxu0
  %v726 = vpop.f32.mrb[0].mxu0
  %727 = vdwg.mxu0
  %v728 = vsel %vm111, %v681, 0.0
  %v729 = vsel %vm111, %v683, 0.0
  %v730 = vadd.f32 %v728, %v729
  %v731 = vsel %vm111, %v722, 0.0
  %v732 = vadd.f32 %v730, %v731
  %v733 = vsel %vm111, %v724, 0.0
  %v734 = vadd.f32 %v732, %v733
  %735 = vadd.xlane.f32.xlu0 %v734
  %v736 = vpop.xlane.xlu0 %735
  %v737 = vmul.f32 %v736, 0.001953125
  %v738 = vsub.f32 %v681, %v737
  %v739 = vsub.f32 %v683, %v737
  %v740 = vsub.f32 %v722, %v737
  %v741 = vsub.f32 %v724, %v737
  %v742 = vmul.f32 %v738, %v738
  %v743 = vmul.f32 %v739, %v739
  %v744 = vmul.f32 %v740, %v740
  %v745 = vmul.f32 %v741, %v741
  %v746 = vsel %vm111, %v742, 0.0
  %v747 = vsel %vm111, %v743, 0.0
  %v748 = vadd.f32 %v746, %v747
  %v749 = vsel %vm111, %v744, 0.0
  %v750 = vadd.f32 %v748, %v749
  %v751 = vsel %vm111, %v745, 0.0
  %v752 = vadd.f32 %v750, %v751
  %753 = vadd.xlane.f32.xlu0 %v752
  %v754 = vpop.xlane.xlu0 %753
  %v755 = vmul.f32 %v754, 0.001953125
  %v756 = vadd.f32 %v755, 1e-05
  %v757 = vrsqrt.pop %v756
  %v758 = vmul.f32 %v28, %v757
  %760 = vset.pattern.permute.xlu0 0
  %761 = vperm.xlu0 %760, %v758
  %v762 = vpop.permute.xlu0 %761
  %v764 = vmul.f32 %v738, %v762
  %v765 = vmul.f32 %v739, %v762
  %v766 = vmul.f32 %v740, %v762
  %v767 = vmul.f32 %v741, %v762
  %769 = vset.pattern.permute.xlu0 0
  %770 = vperm.xlu0 %769, %v29
  %v771 = vpop.permute.xlu0 %770
  %v773 = vadd.f32 %v764, %v771
  %v774 = vadd.f32 %v765, %v771
  %v775 = vadd.f32 %v766, %v771
  %v776 = vadd.f32 %v767, %v771
  %vm777 = vcmp.gt.f32.partialorder %v773, 0.0
  %vm778 = vcmp.gt.f32.partialorder %v774, 0.0
  %vm779 = vcmp.gt.f32.partialorder %v775, 0.0
  %vm780 = vcmp.gt.f32.partialorder %v776, 0.0
  %v781 = vstv %s30
  %v782 = vmul.f32 %v781, %v773
  %v783 = vmul.f32 %v781, %v774
  %v784 = vmul.f32 %v781, %v775
  %v785 = vmul.f32 %v781, %v776
  %v786 = vsel %vm777, %v773, %v782
  %v787 = vsel %vm778, %v774, %v783
  %v788 = vsel %vm779, %v775, %v784
  %v789 = vsel %vm780, %v776, %v785
  %vm790 = vcmask 134144
  %791 = vst.msk [vmem:[#allocation2] sm:$0xf] %vm790, 0.0
  %vm792 = vcmask 273544
  %793 = vst.msk [vmem:[#allocation2 + $0x10] sm:$0xf] %vm792, 0.0
  %v798 = vcombine.low %v786, %v787
  %v799 = vcombine.low %v788, %v789
  %800 = vrot.lane.b32.xlu0 %v798, 17
  %v801 = vpop.permute.xlu0 %800
  %802 = vrot.lane.b32.xlu0 %v799, 17
  %v803 = vpop.permute.xlu0 %802
  %v804 = vrot.slane %v801, 4
  %v805 = vrot.slane %v803, 4
  %vm806 = vcmask 138240
  %v807 = vsel %vm806, %v804, %v801
  %v808 = vsel %vm111, %v804, %v805
  %v809 = vsel %vm806, %v808, %v803
  %vm813 = vcmask 1043592
  %vm814 = vcmask 1047556
  %vm815 = vmor %vm814, %vm813
  %816 = vst.msk [vmem:[#allocation2] sm:$0xff] %vm815, %v807
  %817 = vst [vmem:[#allocation2 + $0x8] sm:$0xff] %v809
  %818 = vst.msk [vmem:[#allocation2 + $0x10] sm:$0xf] %vm790, %v805
  %v819 = vld [vmem:[%s3] sm:$0x3]
  %v820 = vld [vmem:[#allocation2] sm:$0xff]
  %v821 = vld [vmem:[#allocation2 + $0x8] sm:$0xff]
  %v822 = vmul.f32 %v820, %v62
  %v823 = vmul.f32 %v821, %v63
  %v826 = vcombine.high %v822, %v822
  %v827 = vcombine.high %v823, %v823
  %830 = vst [vmem:[#allocation3] sm:$0xf] %v822
  %831 = vst [vmem:[#allocation3 + $0x8] sm:$0xf] %v826
  %832 = vst [vmem:[#allocation3 + $0x10] sm:$0xf] %v823
  %833 = vst [vmem:[#allocation3 + $0x18] sm:$0xf] %v827
  %v834 = vld [vmem:[#allocation2] sm:$0xff]
  %v835 = vld [vmem:[#allocation2 + $0x8] sm:$0xff]
  %v836 = vld [vmem:[#allocation2 + $0x10] sm:$0xf]
  %v837 = vmul.f32 %v834, %v110
  %v838 = vmul.f32 %v835, %v113
  %v839 = vmul.f32 %v836, %v108
  %v843 = vcombine.low %v837, %v837
  %v844 = vcombine.low %v838, %v838
  %v845 = vcombine.low %v839, %v839
  %846 = vrot.lane.b32.xlu0 %v843, 127
  %v847 = vpop.permute.xlu0 %846
  %848 = vrot.lane.b32.xlu0 %v837, 127
  %v849 = vpop.permute.xlu0 %848
  %850 = vrot.lane.b32.xlu0 %v844, 127
  %v851 = vpop.permute.xlu0 %850
  %852 = vrot.lane.b32.xlu0 %v838, 127
  %v853 = vpop.permute.xlu0 %852
  %854 = vrot.lane.b32.xlu0 %v845, 127
  %v855 = vpop.permute.xlu0 %854
  %v856 = vsel %vm136, %v847, %v849
  %v857 = vsel %vm136, %v849, %v851
  %v858 = vsel %vm136, %v851, %v853
  %v859 = vsel %vm136, %v853, %v855
  %864 = vst [vmem:[#allocation3] sm:$0xf0] %v856
  %865 = vst [vmem:[#allocation3 + $0x8] sm:$0xf0] %v857
  %866 = vst [vmem:[#allocation3 + $0x10] sm:$0xf0] %v858
  %867 = vst [vmem:[#allocation3 + $0x18] sm:$0xf0] %v859
  %v868 = vld [vmem:[#allocation2] sm:$0xff]
  %v869 = vld [vmem:[#allocation2 + $0x8] sm:$0xff]
  %v870 = vld [vmem:[#allocation2 + $0x10] sm:$0xf]
  %v871 = vmul.f32 %v868, %v181
  %v872 = vmul.f32 %v869, %v183
  %v873 = vmul.f32 %v870, %v179
  %v877 = vcombine.high %v871, %v871
  %v878 = vcombine.high %v872, %v872
  %879 = vrot.lane.b32.xlu0 %v871, 126
  %v880 = vpop.permute.xlu0 %879
  %881 = vrot.lane.b32.xlu0 %v877, 126
  %v882 = vpop.permute.xlu0 %881
  %883 = vrot.lane.b32.xlu0 %v872, 126
  %v884 = vpop.permute.xlu0 %883
  %885 = vrot.lane.b32.xlu0 %v878, 126
  %v886 = vpop.permute.xlu0 %885
  %887 = vrot.lane.b32.xlu0 %v873, 126
  %v888 = vpop.permute.xlu0 %887
  %v889 = vsel %vm205, %v880, %v882
  %v890 = vsel %vm205, %v882, %v884
  %v891 = vsel %vm205, %v884, %v886
  %v892 = vsel %vm205, %v886, %v888
  %897 = vst [vmem:[#allocation3 + $0x20] sm:$0xf] %v889
  %898 = vst [vmem:[#allocation3 + $0x28] sm:$0xf] %v890
  %899 = vst [vmem:[#allocation3 + $0x30] sm:$0xf] %v891
  %900 = vst [vmem:[#allocation3 + $0x38] sm:$0xf] %v892
  %v901 = vld [vmem:[#allocation2] sm:$0xff]
  %v902 = vld [vmem:[#allocation2 + $0x8] sm:$0xff]
  %v903 = vld [vmem:[#allocation2 + $0x10] sm:$0xf]
  %v904 = vmul.f32 %v901, %v250
  %v905 = vmul.f32 %v902, %v252
  %v906 = vmul.f32 %v903, %v248
  %v910 = vcombine.low %v904, %v904
  %v911 = vcombine.low %v905, %v905
  %v912 = vcombine.low %v906, %v906
  %913 = vrot.lane.b32.xlu0 %v910, 112
  %v914 = vpop.permute.xlu0 %913
  %915 = vrot.lane.b32.xlu0 %v904, 112
  %v916 = vpop.permute.xlu0 %915
  %917 = vrot.lane.b32.xlu0 %v911, 112
  %v918 = vpop.permute.xlu0 %917
  %919 = vrot.lane.b32.xlu0 %v905, 112
  %v920 = vpop.permute.xlu0 %919
  %921 = vrot.lane.b32.xlu0 %v912, 112
  %v922 = vpop.permute.xlu0 %921
  %v923 = vsel %vm275, %v914, %v916
  %v924 = vsel %vm275, %v916, %v918
  %v925 = vsel %vm275, %v918, %v920
  %v926 = vsel %vm275, %v920, %v922
  %931 = vst [vmem:[#allocation3 + $0x20] sm:$0xf0] %v923
  %932 = vst [vmem:[#allocation3 + $0x28] sm:$0xf0] %v924
  %933 = vst [vmem:[#allocation3 + $0x30] sm:$0xf0] %v925
  %934 = vst [vmem:[#allocation3 + $0x38] sm:$0xf0] %v926
  %v935 = vld [vmem:[#allocation2] sm:$0xff]
  %v936 = vld [vmem:[#allocation2 + $0x8] sm:$0xff]
  %v937 = vld [vmem:[#allocation2 + $0x10] sm:$0xf]
  %v941 = vcombine.high %v935, %v935
  %v942 = vcombine.high %v936, %v936
  %943 = vrot.lane.b32.xlu0 %v935, 111
  %v944 = vpop.permute.xlu0 %943
  %945 = vrot.lane.b32.xlu0 %v941, 111
  %v946 = vpop.permute.xlu0 %945
  %947 = vrot.lane.b32.xlu0 %v936, 111
  %v948 = vpop.permute.xlu0 %947
  %949 = vrot.lane.b32.xlu0 %v942, 111
  %v950 = vpop.permute.xlu0 %949
  %951 = vrot.lane.b32.xlu0 %v937, 111
  %v952 = vpop.permute.xlu0 %951
  %v953 = vsel %vm306, %v944, %v946
  %v954 = vsel %vm306, %v946, %v948
  %v955 = vsel %vm306, %v948, %v950
  %v956 = vsel %vm306, %v950, %v952
  %961 = vst [vmem:[#allocation3 + $0x40] sm:$0xf] %v953
  %962 = vst [vmem:[#allocation3 + $0x48] sm:$0xf] %v954
  %963 = vst [vmem:[#allocation3 + $0x50] sm:$0xf] %v955
  %964 = vst [vmem:[#allocation3 + $0x58] sm:$0xf] %v956
  %v965 = vld [vmem:[#allocation2] sm:$0xff]
  %v966 = vld [vmem:[#allocation2 + $0x8] sm:$0xff]
  %v967 = vld [vmem:[#allocation2 + $0x10] sm:$0xf]
  %v968 = vmul.f32 %v965, %v351
  %v969 = vmul.f32 %v966, %v353
  %v970 = vmul.f32 %v967, %v349
  %v974 = vcombine.low %v968, %v968
  %v975 = vcombine.low %v969, %v969
  %v976 = vcombine.low %v970, %v970
  %977 = vrot.lane.b32.xlu0 %v974, 110
  %v978 = vpop.permute.xlu0 %977
  %979 = vrot.lane.b32.xlu0 %v968, 110
  %v980 = vpop.permute.xlu0 %979
  %981 = vrot.lane.b32.xlu0 %v975, 110
  %v982 = vpop.permute.xlu0 %981
  %983 = vrot.lane.b32.xlu0 %v969, 110
  %v984 = vpop.permute.xlu0 %983
  %985 = vrot.lane.b32.xlu0 %v976, 110
  %v986 = vpop.permute.xlu0 %985
  %v987 = vsel %vm376, %v978, %v980
  %v988 = vsel %vm376, %v980, %v982
  %v989 = vsel %vm376, %v982, %v984
  %v990 = vsel %vm376, %v984, %v986
  %995 = vst [vmem:[#allocation3 + $0x40] sm:$0xf0] %v987
  %996 = vst [vmem:[#allocation3 + $0x48] sm:$0xf0] %v988
  %997 = vst [vmem:[#allocation3 + $0x50] sm:$0xf0] %v989
  %998 = vst [vmem:[#allocation3 + $0x58] sm:$0xf0] %v990
  %v999 = vld [vmem:[#allocation2] sm:$0xff]
  %v1000 = vld [vmem:[#allocation2 + $0x8] sm:$0xff]
  %v1001 = vld [vmem:[#allocation2 + $0x10] sm:$0xf]
  %v1002 = vmul.f32 %v999, %v421
  %v1003 = vmul.f32 %v1000, %v423
  %v1004 = vmul.f32 %v1001, %v419
  %v1008 = vcombine.high %v1002, %v1002
  %v1009 = vcombine.high %v1003, %v1003
  %1010 = vrot.lane.b32.xlu0 %v1002, 96
  %v1011 = vpop.permute.xlu0 %1010
  %1012 = vrot.lane.b32.xlu0 %v1008, 96
  %v1013 = vpop.permute.xlu0 %1012
  %1014 = vrot.lane.b32.xlu0 %v1003, 96
  %v1015 = vpop.permute.xlu0 %1014
  %1016 = vrot.lane.b32.xlu0 %v1009, 96
  %v1017 = vpop.permute.xlu0 %1016
  %1018 = vrot.lane.b32.xlu0 %v1004, 96
  %v1019 = vpop.permute.xlu0 %1018
  %v1020 = vsel %vm445, %v1011, %v1013
  %v1021 = vsel %vm445, %v1013, %v1015
  %v1022 = vsel %vm445, %v1015, %v1017
  %v1023 = vsel %vm445, %v1017, %v1019
  %1028 = vst [vmem:[#allocation3 + $0x60] sm:$0xf] %v1020
  %1029 = vst [vmem:[#allocation3 + $0x68] sm:$0xf] %v1021
  %1030 = vst [vmem:[#allocation3 + $0x70] sm:$0xf] %v1022
  %1031 = vst [vmem:[#allocation3 + $0x78] sm:$0xf] %v1023
  %v1032 = vld [vmem:[#allocation2] sm:$0xff]
  %v1033 = vld [vmem:[#allocation2 + $0x8] sm:$0xff]
  %v1034 = vld [vmem:[#allocation2 + $0x10] sm:$0xf]
  %v1035 = vmul.f32 %v1032, %v490
  %v1036 = vmul.f32 %v1033, %v492
  %v1037 = vmul.f32 %v1034, %v488
  %v1041 = vcombine.low %v1035, %v1035
  %v1042 = vcombine.low %v1036, %v1036
  %v1043 = vcombine.low %v1037, %v1037
  %1044 = vrot.lane.b32.xlu0 %v1041, 95
  %v1045 = vpop.permute.xlu0 %1044
  %1046 = vrot.lane.b32.xlu0 %v1035, 95
  %v1047 = vpop.permute.xlu0 %1046
  %1048 = vrot.lane.b32.xlu0 %v1042, 95
  %v1049 = vpop.permute.xlu0 %1048
  %1050 = vrot.lane.b32.xlu0 %v1036, 95
  %v1051 = vpop.permute.xlu0 %1050
  %1052 = vrot.lane.b32.xlu0 %v1043, 95
  %v1053 = vpop.permute.xlu0 %1052
  %v1054 = vsel %vm515, %v1045, %v1047
  %v1055 = vsel %vm515, %v1047, %v1049
  %v1056 = vsel %vm515, %v1049, %v1051
  %v1057 = vsel %vm515, %v1051, %v1053
  %1062 = vst [vmem:[#allocation3 + $0x60] sm:$0xf0] %v1054
  %1063 = vst [vmem:[#allocation3 + $0x68] sm:$0xf0] %v1055
  %1064 = vst [vmem:[#allocation3 + $0x70] sm:$0xf0] %v1056
  %1065 = vst [vmem:[#allocation3 + $0x78] sm:$0xf0] %v1057
  %v1066 = vld [vmem:[#allocation2] sm:$0xff]
  %v1067 = vld [vmem:[#allocation2 + $0x8] sm:$0xff]
  %v1068 = vld [vmem:[#allocation2 + $0x10] sm:$0xf]
  %v1069 = vmul.f32 %v1066, %v560
  %v1070 = vmul.f32 %v1067, %v562
  %v1071 = vmul.f32 %v1068, %v558
  %v1075 = vcombine.high %v1069, %v1069
  %v1076 = vcombine.high %v1070, %v1070
  %1077 = vrot.lane.b32.xlu0 %v1069, 94
  %v1078 = vpop.permute.xlu0 %1077
  %1079 = vrot.lane.b32.xlu0 %v1075, 94
  %v1080 = vpop.permute.xlu0 %1079
  %1081 = vrot.lane.b32.xlu0 %v1070, 94
  %v1082 = vpop.permute.xlu0 %1081
  %1083 = vrot.lane.b32.xlu0 %v1076, 94
  %v1084 = vpop.permute.xlu0 %1083
  %1085 = vrot.lane.b32.xlu0 %v1071, 94
  %v1086 = vpop.permute.xlu0 %1085
  %v1087 = vsel %vm584, %v1078, %v1080
  %v1088 = vsel %vm584, %v1080, %v1082
  %v1089 = vsel %vm584, %v1082, %v1084
  %v1090 = vsel %vm584, %v1084, %v1086
  %1095 = vst [vmem:[#allocation3 + $0x80] sm:$0xf] %v1087
  %1096 = vst [vmem:[#allocation3 + $0x88] sm:$0xf] %v1088
  %1097 = vst [vmem:[#allocation3 + $0x90] sm:$0xf] %v1089
  %1098 = vst [vmem:[#allocation3 + $0x98] sm:$0xf] %v1090
  %v1099 = vld [vmem:[#allocation3] sm:$0xff]
  %v1100 = vld [vmem:[#allocation3 + $0x8] sm:$0xff]
  %v1101 = vld [vmem:[#allocation3 + $0x10] sm:$0xff]
  %v1102 = vld [vmem:[#allocation3 + $0x18] sm:$0xff]
  %v1103 = vld [vmem:[#allocation3 + $0x20] sm:$0xff]
  %v1104 = vld [vmem:[#allocation3 + $0x28] sm:$0xff]
  %v1105 = vld [vmem:[#allocation3 + $0x30] sm:$0xff]
  %v1106 = vld [vmem:[#allocation3 + $0x38] sm:$0xff]
  %v1107 = vld [vmem:[#allocation3 + $0x40] sm:$0xff]
  %v1108 = vld [vmem:[#allocation3 + $0x48] sm:$0xff]
  %v1109 = vld [vmem:[#allocation3 + $0x50] sm:$0xff]
  %v1110 = vld [vmem:[#allocation3 + $0x58] sm:$0xff]
  %v1111 = vld [vmem:[#allocation3 + $0x60] sm:$0xff]
  %v1112 = vld [vmem:[#allocation3 + $0x68] sm:$0xff]
  %v1113 = vld [vmem:[#allocation3 + $0x70] sm:$0xff]
  %v1114 = vld [vmem:[#allocation3 + $0x78] sm:$0xff]
  %v1115 = vld [vmem:[#allocation3 + $0x80] sm:$0xf]
  %v1116 = vld [vmem:[#allocation3 + $0x88] sm:$0xf]
  %v1117 = vld [vmem:[#allocation3 + $0x90] sm:$0xf]
  %v1118 = vld [vmem:[#allocation3 + $0x98] sm:$0xf]
  %v1119 = vpack.c.bf16 %v1103, %v1099
  %v1120 = vpack.c.bf16 %v1104, %v1100
  %v1121 = vpack.c.bf16 %v1105, %v1101
  %v1122 = vpack.c.bf16 %v1106, %v1102
  %v1123 = vpack.c.bf16 %v1111, %v1107
  %v1124 = vpack.c.bf16 %v1112, %v1108
  %v1125 = vpack.c.bf16 %v1113, %v1109
  %v1126 = vpack.c.bf16 %v1114, %v1110
  %v1127 = vpack.c.bf16 %v1115, %v1115
  %v1128 = vpack.c.bf16 %v1116, %v1116
  %v1129 = vpack.c.bf16 %v1117, %v1117
  %v1130 = vpack.c.bf16 %v1118, %v1118
  %v1132 = vsel %vm629, %v819, 0
  %v1135 = vsel %vm633, %v1127, 0
  %v1138 = vsel %vm633, %v1128, 0
  %v1141 = vsel %vm633, %v1129, 0
  %v1144 = vsel %vm633, %v1130, 0
  %1146 = vmatprep.subr.bf16.mxu0 %v1120
  %1147 = vmatpush1.bf16.msra.mxu0 %v1119
  %1148 = vmatprep.subr.bf16.mxu0 %v1124
  %1149 = vmatpush1.bf16.msra.mxu0 %v1123
  %1150 = vmatprep.subr.bf16.mxu0 %v1138
  %1151 = vmatpush1.bf16.msra.mxu0 %v1135
  %1152 = vmatprep.subr.bf16.mxu0 0
  %1153 = vmatpush1.bf16.msra.mxu0 0
  %1154 = vmatprep.subr.bf16.mxu0 0
  %1155 = vmatpush1.bf16.msra.mxu0 0
  %1156 = vmatprep.subr.bf16.mxu0 0
  %1157 = vmatpush1.bf16.msra.mxu0 0
  %1158 = vmatprep.subr.bf16.mxu0 0
  %1159 = vmatpush1.bf16.msra.mxu0 0
  %1160 = vmatprep.subr.bf16.mxu0 0
  %1161 = vmatpush1.bf16.msra.mxu0 0
  %1162 = vmatprep.subr.bf16.mxu0 0
  %1163 = vmatpush1.bf16.msra.mxu0 0
  %1164 = vmatprep.subr.bf16.mxu0 0
  %1165 = vmatpush1.bf16.msra.mxu0 0
  %1166 = vmatprep.subr.bf16.mxu0 0
  %1167 = vmatpush1.bf16.msra.mxu0 0
  %1168 = vmatprep.subr.bf16.mxu0 0
  %1169 = vmatpush1.bf16.msra.mxu0 0
  %1170 = vmatprep.subr.bf16.mxu0 0
  %1171 = vmatpush1.bf16.msra.mxu0 0
  %1172 = vmatprep.subr.bf16.mxu0 0
  %1173 = vmatpush1.bf16.msra.mxu0 0
  %1174 = vmatprep.subr.bf16.mxu0 0
  %1175 = vmatpush1.bf16.msra.mxu0 0
  %1176 = vmatprep.subr.bf16.mxu0 0
  %1177 = vmatpush1.bf16.msra.mxu0 0
  %1178 = vmatprep.mubr.bf16.mxu0 0
  %1179 = vmatmul.mubr.bf16.gmra.mrb[0].mxu0 %v1132
  %v1180 = vpop.f32.mrb[0].mxu0
  %v1181 = vadd.f32 0.0, %v1180
  %v1182 = vpop.f32.mrb[0].mxu0
  %v1183 = vadd.f32 0.0, %v1182
  %v1184 = vpop.f32.mrb[0].mxu0
  %v1185 = vpop.f32.mrb[0].mxu0
  %1186 = vdwg.mxu0
  %1187 = vmatprep.subr.bf16.mxu0 %v1122
  %1188 = vmatpush1.bf16.msra.mxu0 %v1121
  %1189 = vmatprep.subr.bf16.mxu0 %v1126
  %1190 = vmatpush1.bf16.msra.mxu0 %v1125
  %1191 = vmatprep.subr.bf16.mxu0 %v1144
  %1192 = vmatpush1.bf16.msra.mxu0 %v1141
  %1193 = vmatprep.subr.bf16.mxu0 0
  %1194 = vmatpush1.bf16.msra.mxu0 0
  %1195 = vmatprep.subr.bf16.mxu0 0
  %1196 = vmatpush1.bf16.msra.mxu0 0
  %1197 = vmatprep.subr.bf16.mxu0 0
  %1198 = vmatpush1.bf16.msra.mxu0 0
  %1199 = vmatprep.subr.bf16.mxu0 0
  %1200 = vmatpush1.bf16.msra.mxu0 0
  %1201 = vmatprep.subr.bf16.mxu0 0
  %1202 = vmatpush1.bf16.msra.mxu0 0
  %1203 = vmatprep.subr.bf16.mxu0 0
  %1204 = vmatpush1.bf16.msra.mxu0 0
  %1205 = vmatprep.subr.bf16.mxu0 0
  %1206 = vmatpush1.bf16.msra.mxu0 0
  %1207 = vmatprep.subr.bf16.mxu0 0
  %1208 = vmatpush1.bf16.msra.mxu0 0
  %1209 = vmatprep.subr.bf16.mxu0 0
  %1210 = vmatpush1.bf16.msra.mxu0 0
  %1211 = vmatprep.subr.bf16.mxu0 0
  %1212 = vmatpush1.bf16.msra.mxu0 0
  %1213 = vmatprep.subr.bf16.mxu0 0
  %1214 = vmatpush1.bf16.msra.mxu0 0
  %1215 = vmatprep.subr.bf16.mxu0 0
  %1216 = vmatpush1.bf16.msra.mxu0 0
  %1217 = vmatprep.subr.bf16.mxu0 0
  %1218 = vmatpush1.bf16.msra.mxu0 0
  %1219 = vmatprep.mubr.bf16.mxu0 0
  %1220 = vmatmul.mubr.bf16.gmra.mrb[0].mxu0 %v1132
  %v1221 = vpop.f32.mrb[0].mxu0
  %v1222 = vadd.f32 0.0, %v1221
  %v1223 = vpop.f32.mrb[0].mxu0
  %v1224 = vadd.f32 0.0, %v1223
  %v1225 = vpop.f32.mrb[0].mxu0
  %v1226 = vpop.f32.mrb[0].mxu0
  %1227 = vdwg.mxu0
  %v1228 = vsel %vm111, %v1181, 0.0
  %v1229 = vsel %vm111, %v1183, 0.0
  %v1230 = vadd.f32 %v1228, %v1229
  %v1231 = vsel %vm111, %v1222, 0.0
  %v1232 = vadd.f32 %v1230, %v1231
  %v1233 = vsel %vm111, %v1224, 0.0
  %v1234 = vadd.f32 %v1232, %v1233
  %1235 = vadd.xlane.f32.xlu0 %v1234
  %v1236 = vpop.xlane.xlu0 %1235
  %v1237 = vmul.f32 %v1236, 0.001953125
  %v1238 = vsub.f32 %v1181, %v1237
  %v1239 = vsub.f32 %v1183, %v1237
  %v1240 = vsub.f32 %v1222, %v1237
  %v1241 = vsub.f32 %v1224, %v1237
  %v1242 = vmul.f32 %v1238, %v1238
  %v1243 = vmul.f32 %v1239, %v1239
  %v1244 = vmul.f32 %v1240, %v1240
  %v1245 = vmul.f32 %v1241, %v1241
  %v1246 = vsel %vm111, %v1242, 0.0
  %v1247 = vsel %vm111, %v1243, 0.0
  %v1248 = vadd.f32 %v1246, %v1247
  %v1249 = vsel %vm111, %v1244, 0.0
  %v1250 = vadd.f32 %v1248, %v1249
  %v1251 = vsel %vm111, %v1245, 0.0
  %v1252 = vadd.f32 %v1250, %v1251
  %1253 = vadd.xlane.f32.xlu0 %v1252
  %v1254 = vpop.xlane.xlu0 %1253
  %v1255 = vmul.f32 %v1254, 0.001953125
  %v1256 = vadd.f32 %v1255, 1e-05
  %v1257 = vrsqrt.pop %v1256
  %v1258 = vmul.f32 %v28, %v1257
  %1260 = vset.pattern.permute.xlu0 0
  %1261 = vperm.xlu0 %1260, %v1258
  %v1262 = vpop.permute.xlu0 %1261
  %v1264 = vmul.f32 %v1238, %v1262
  %v1265 = vmul.f32 %v1239, %v1262
  %v1266 = vmul.f32 %v1240, %v1262
  %v1267 = vmul.f32 %v1241, %v1262
  %v1268 = vadd.f32 %v1264, %v771
  %v1269 = vadd.f32 %v1265, %v771
  %v1270 = vadd.f32 %v1266, %v771
  %v1271 = vadd.f32 %v1267, %v771
  %v1272 = vld [vmem:[%s0] sm:$0xff]
  %v1273 = vld [vmem:[%s0 + $0x8] sm:$0xff]
  %v1274 = vld [vmem:[%s0 + $0x10] sm:$0xf]
  %v1278 = vcombine.high %v1272, %v1272
  %v1279 = vcombine.high %v1273, %v1273
  %1280 = vrot.lane.b32.xlu0 %v1272, 111
  %v1281 = vpop.permute.xlu0 %1280
  %1282 = vrot.lane.b32.xlu0 %v1278, 111
  %v1283 = vpop.permute.xlu0 %1282
  %1284 = vrot.lane.b32.xlu0 %v1273, 111
  %v1285 = vpop.permute.xlu0 %1284
  %1286 = vrot.lane.b32.xlu0 %v1279, 111
  %v1287 = vpop.permute.xlu0 %1286
  %1288 = vrot.lane.b32.xlu0 %v1274, 111
  %v1289 = vpop.permute.xlu0 %1288
  %v1290 = vsel %vm306, %v1281, %v1283
  %v1291 = vsel %vm306, %v1283, %v1285
  %v1292 = vsel %vm306, %v1285, %v1287
  %v1293 = vsel %vm306, %v1287, %v1289
  %v1298 = vadd.f32 %v1268, %v1290
  %v1299 = vadd.f32 %v1269, %v1291
  %v1300 = vadd.f32 %v1270, %v1292
  %v1301 = vadd.f32 %v1271, %v1293
  %vm1302 = vcmp.gt.f32.partialorder %v1298, 0.0
  %vm1303 = vcmp.gt.f32.partialorder %v1299, 0.0
  %vm1304 = vcmp.gt.f32.partialorder %v1300, 0.0
  %vm1305 = vcmp.gt.f32.partialorder %v1301, 0.0
  %v1306 = vmul.f32 %v781, %v1298
  %v1307 = vmul.f32 %v781, %v1299
  %v1308 = vmul.f32 %v781, %v1300
  %v1309 = vmul.f32 %v781, %v1301
  %v1310 = vsel %vm1302, %v1298, %v1306
  %v1311 = vsel %vm1303, %v1299, %v1307
  %v1312 = vsel %vm1304, %v1300, %v1308
  %v1313 = vsel %vm1305, %v1301, %v1309
  %v1318 = vcombine.low %v1310, %v1311
  %v1319 = vcombine.low %v1312, %v1313
  %1322 = vst [vmem:[%s7] sm:$0xff] %v1318
  %1323 = vst [vmem:[%s7 + $0x8] sm:$0xff] %v1319
  // Predicated region
  $region30: #{resblock_forward.1} parent=0 // pred_check
    _
  $region31: #{resblock_forward.1} parent=0 // pred_check_branch
    %1325 = sbr.rel (0) target = $region33
  $region32: #{resblock_forward.1} parent=0 // pred_region
    _
  $region33: #{resblock_forward.1} parent=0 // pred_fallthru
    _
  // Predicated region
  $region34: #{resblock_forward.1} parent=0 // pred_check
    _
  $region35: #{resblock_forward.1} parent=0 // pred_check_branch
    %1327 = sbr.rel (0) target = $region37
  $region36: #{resblock_forward.1} parent=0 // pred_region
    _
  $region37: #{resblock_forward.1} parent=0 // pred_fallthru
    _

</llo_original>
